<compile_context>
chip_gen: v5e
topology: v5e:2x2
jax: 0.10.0
libtpu: 0.0.40
codegen_flags: <defaults>
</compile_context>

<pallas_src>
import jax
import jax.numpy as jnp
from jax.experimental import pallas as pl
from jax.experimental.pallas import tpu as pltpu


def gae_teacher_kernel(a_ref, x_chunk_ref, x_self_ref, inv_deg_ref,
                       w_enc_ref, b_enc_ref, w_dec_ref, b_dec_ref,
                       z_ref, recon_ref, h_acc_ref):
    # a_ref:       (tile_n, tile_k)  bf16 adjacency tile (rows = this node tile)
    # x_chunk_ref: (tile_k, Fin)     neighbor-feature chunk for this K step
    # x_self_ref:  (tile_n, Fin)     self features of this node tile
    # inv_deg_ref: (tile_n, 1)       1 / max(in_degree, 1)
    # w_enc_ref:   (2*Fin, H)        [W_self ; W_neigh] stacked
    # h_acc_ref:   (tile_n, Fin)     f32 VMEM accumulator for sum_j A[i,j] * x[j]
    k = pl.program_id(1)

    @pl.when(k == 0)
    def _init():
        h_acc_ref[...] = jnp.zeros_like(h_acc_ref)

    # Aggregation partial sum.  A is exactly 0/1, so bf16 storage is lossless;
    # upcast to f32 keeps the arithmetic identical to the fp32 reference while
    # halving the dominant HBM read.
    a = a_ref[...].astype(jnp.float32)
    h_acc_ref[...] += jnp.dot(a, x_chunk_ref[...],
                              preferred_element_type=jnp.float32)

    @pl.when(k == pl.num_programs(1) - 1)
    def _finalize():
        # Mean aggregation (DGL: isolated nodes -> 0, handled by inv_deg clamp).
        h_neigh = h_acc_ref[...] * inv_deg_ref[...]

        # Fused encoder: one K = 2*Fin MXU pass instead of two K = Fin passes.
        xe = jnp.concatenate([x_self_ref[...], h_neigh], axis=-1)
        z = jnp.dot(xe, w_enc_ref[...], preferred_element_type=jnp.float32)
        z = jnp.maximum(z + b_enc_ref[...], 0.0)                  # relu
        z_ref[...] = z.astype(z_ref.dtype)

        recon = jnp.dot(z, w_dec_ref[...],
                        preferred_element_type=jnp.float32) + b_dec_ref[...]
        recon_ref[...] = recon.astype(recon_ref.dtype)


def gae_teacher_forward(adj, x, w_self, w_neigh, b_enc, w_dec, b_dec,
                        *, tile_n=256, tile_k=256):
    """adj: [N, N] (0/1, adj[i, j]=1 iff edge j->i), x: [N, Fin].
    Weights already stored as [in, out]."""
    N, Fin = x.shape
    H = w_self.shape[1]
    tile_n = min(tile_n, N)
    tile_k = min(tile_k, N)
    assert N % tile_n == 0 and N % tile_k == 0
    assert tile_n % 8 == 0 and tile_k % 128 == 0
    # Lane-dense outputs / full-width MXU columns (module defaults are 128/128).
    assert Fin % 128 == 0 and H % 128 == 0, "pad feature dims to multiples of 128"

    # Degree normalization hoisted out of the kernel (degrees are ordinarily
    # available as node metadata); clamp matches DGL mean for isolated nodes.
    deg = jnp.maximum(jnp.sum(adj, axis=-1, keepdims=True), 1.0)
    inv_deg = (1.0 / deg).astype(jnp.float32)

    adj_bf16 = adj.astype(jnp.bfloat16)                    # exact for 0/1 entries
    w_enc = jnp.concatenate([w_self, w_neigh], axis=0)     # (2*Fin, H)
    b_enc2 = b_enc.reshape(1, H)
    b_dec2 = b_dec.reshape(1, Fin)

    grid = (N // tile_n, N // tile_k)

    # Scoped-VMEM budget: double-buffered streamed blocks + resident weights +
    # accumulator scratch, with ~1.5x headroom; clamped to the v7x physical cap.
    vmem_bytes = int(1.5 * (
        2 * tile_n * tile_k * 2                       # adjacency tile (bf16)
        + 2 * tile_k * Fin * 4                        # neighbor feature chunk
        + 2 * tile_n * Fin * 4                        # self feature tile
        + 2 * tile_n * 4                              # inv_deg tile
        + 2 * (2 * Fin * H + H * Fin + H + Fin) * 4   # weights + biases
        + 2 * tile_n * (H + Fin) * 4                  # z / recon output tiles
        + tile_n * Fin * 4                            # accumulator scratch
    )) + (4 << 20)
    vmem_bytes = min(max(vmem_bytes, 16 << 20), 64 << 20)

    z, recon = pl.pallas_call(
        gae_teacher_kernel,
        out_shape=(jax.ShapeDtypeStruct((N, H), jnp.float32),
                   jax.ShapeDtypeStruct((N, Fin), jnp.float32)),
        grid_spec=pltpu.PrefetchScalarGridSpec(
            num_scalar_prefetch=0,
            grid=grid,
            in_specs=[
                pl.BlockSpec((tile_n, tile_k), lambda i, k: (i, k)),  # A tile
                pl.BlockSpec((tile_k, Fin),    lambda i, k: (k, 0)),  # X neighbor chunk
                pl.BlockSpec((tile_n, Fin),    lambda i, k: (i, 0)),  # X self tile
                pl.BlockSpec((tile_n, 1),      lambda i, k: (i, 0)),  # inv_deg
                pl.BlockSpec((2 * Fin, H),     lambda i, k: (0, 0)),  # [W_self; W_neigh]
                pl.BlockSpec((1, H),           lambda i, k: (0, 0)),  # encoder bias
                pl.BlockSpec((H, Fin),         lambda i, k: (0, 0)),  # W_dec^T
                pl.BlockSpec((1, Fin),         lambda i, k: (0, 0)),  # decoder bias
            ],
            out_specs=[
                pl.BlockSpec((tile_n, H),   lambda i, k: (i, 0)),     # z
                pl.BlockSpec((tile_n, Fin), lambda i, k: (i, 0)),     # recon
            ],
            scratch_shapes=[pltpu.VMEM((tile_n, Fin), jnp.float32)],
        ),
        compiler_params=pltpu.CompilerParams(
            dimension_semantics=("parallel", "arbitrary"),
            vmem_limit_bytes=vmem_bytes),
    )(adj_bf16, x, x, inv_deg, w_enc, b_enc2, w_dec, b_dec2)
    return z, recon


def reference_forward(adj, x, w_self, w_neigh, b_enc, w_dec, b_dec):
    deg = jnp.maximum(jnp.sum(adj, axis=-1, keepdims=True), 1.0)
    h_neigh = (adj @ x) / deg
    z = jax.nn.relu(x @ w_self + h_neigh @ w_neigh + b_enc)
    recon = z @ w_dec + b_dec
    return z, recon


if __name__ == "__main__":
    # Module defaults: in_feats = hidden_feats = 128.  N chosen so the grid has
    # 2 node tiles x 2 K tiles (exercises accumulation + megacore sharding).
    N = 512
    IN_FEATS = 128
    HIDDEN = 128

    key = jax.random.PRNGKey(0)
    k_adj, k_x, k_ws, k_wn, k_be, k_wd, k_bd = jax.random.split(key, 7)

    # Deterministic random directed graph (dense adjacency, row i = in-edges of i).
    adj = (jax.random.uniform(k_adj, (N, N)) < 0.1).astype(jnp.float32)
    adj = adj * (1.0 - jnp.eye(N, dtype=jnp.float32))       # no self-loops

    x = jax.random.normal(k_x, (N, IN_FEATS), dtype=jnp.float32)

    # Parameters stored transposed to [in, out].
    w_self = jax.random.normal(k_ws, (IN_FEATS, HIDDEN), dtype=jnp.float32) * 0.1
    w_neigh = jax.random.normal(k_wn, (IN_FEATS, HIDDEN), dtype=jnp.float32) * 0.1
    b_enc = jax.random.normal(k_be, (HIDDEN,), dtype=jnp.float32) * 0.1
    w_dec = jax.random.normal(k_wd, (HIDDEN, IN_FEATS), dtype=jnp.float32) * 0.1
    b_dec = jax.random.normal(k_bd, (IN_FEATS,), dtype=jnp.float32) * 0.1

    z, recon = gae_teacher_forward(adj, x, w_self, w_neigh, b_enc, w_dec, b_dec,
                                   tile_n=256, tile_k=256)
    jax.block_until_ready((z, recon))

    z_ref, recon_ref = reference_forward(adj, x, w_self, w_neigh, b_enc, w_dec, b_dec)
    assert jnp.allclose(z, z_ref, atol=1e-4, rtol=1e-4), \
        float(jnp.max(jnp.abs(z - z_ref)))
    assert jnp.allclose(recon, recon_ref, atol=1e-4, rtol=1e-4), \
        float(jnp.max(jnp.abs(recon - recon_ref)))

    print("KERNEL_OK")
</pallas_src>

<mosaic_0001>
module attributes {stable_mosaic.version = 11 : i64} {
  func.func @gae_teacher_kernel(%arg0: i32, %arg1: i32, %arg2: memref<256x256xbf16, #tpu.memory_space<vmem>>, %arg3: memref<256x128xf32, #tpu.memory_space<vmem>>, %arg4: memref<256x128xf32, #tpu.memory_space<vmem>>, %arg5: memref<256x1xf32, #tpu.memory_space<vmem>>, %arg6: memref<256x128xf32, #tpu.memory_space<vmem>>, %arg7: memref<1x128xf32, #tpu.memory_space<vmem>>, %arg8: memref<128x128xf32, #tpu.memory_space<vmem>>, %arg9: memref<1x128xf32, #tpu.memory_space<vmem>>, %arg10: memref<256x128xf32, #tpu.memory_space<vmem>>, %arg11: memref<256x128xf32, #tpu.memory_space<vmem>>, %arg12: memref<256x128xf32, #tpu.memory_space<vmem>>) attributes {dimension_semantics = [#tpu.dimension_semantics<parallel>, #tpu.dimension_semantics<arbitrary>], iteration_bounds = array<i64: 2, 2>, scalar_prefetch = 0 : i64, scratch_operands = 1 : i64, tpu.core_type = #tpu.core_type<tc>, window_params = [{transform_indices = @transform_0, window_bounds = array<i64: 256, 256>}, {transform_indices = @transform_1, window_bounds = array<i64: 256, 128>}, {transform_indices = @transform_2, window_bounds = array<i64: 256, 128>}, {transform_indices = @transform_3, window_bounds = array<i64: 256, 1>}, {pipeline_mode = #tpu.pipeline_mode<synchronous>, transform_indices = @transform_4, window_bounds = array<i64: 256, 128>}, {pipeline_mode = #tpu.pipeline_mode<synchronous>, transform_indices = @transform_5, window_bounds = array<i64: 1, 128>}, {pipeline_mode = #tpu.pipeline_mode<synchronous>, transform_indices = @transform_6, window_bounds = array<i64: 128, 128>}, {pipeline_mode = #tpu.pipeline_mode<synchronous>, transform_indices = @transform_7, window_bounds = array<i64: 1, 128>}, {transform_indices = @transform_8, window_bounds = array<i64: 256, 128>}, {transform_indices = @transform_9, window_bounds = array<i64: 256, 128>}]} {
    %c0_i32 = arith.constant 0 : i32
    %0 = arith.cmpi eq, %arg1, %c0_i32 : i32
    %1 = arith.extui %0 : i1 to i32
    %c0_i32_0 = arith.constant 0 : i32
    %2 = arith.cmpi ne, %1, %c0_i32_0 : i32
    scf.if %2 {
      %cst_9 = arith.constant 0.000000e+00 : f32
      %13 = vector.broadcast %cst_9 : f32 to vector<256x128xf32>
      %c0_10 = arith.constant 0 : index
      %c0_11 = arith.constant 0 : index
      %14 = vector.load %arg12[%c0_10, %c0_11] : memref<256x128xf32, #tpu.memory_space<vmem>>, vector<256x128xf32>
      tpu.vector_store %arg12[%c0_10, %c0_11], %13 {strides = array<i32>} : memref<256x128xf32, #tpu.memory_space<vmem>>, vector<256x128xf32>,
    } else {
    }
    %c0 = arith.constant 0 : index
    %c0_1 = arith.constant 0 : index
    %3 = vector.load %arg2[%c0, %c0_1] : memref<256x256xbf16, #tpu.memory_space<vmem>>, vector<256x256xbf16>
    %4 = arith.extf %3 : vector<256x256xbf16> to vector<256x256xf32>
    %c0_2 = arith.constant 0 : index
    %c0_3 = arith.constant 0 : index
    %5 = vector.load %arg12[%c0_2, %c0_3] : memref<256x128xf32, #tpu.memory_space<vmem>>, vector<256x128xf32>
    %c0_4 = arith.constant 0 : index
    %c0_5 = arith.constant 0 : index
    %6 = vector.load %arg3[%c0_4, %c0_5] : memref<256x128xf32, #tpu.memory_space<vmem>>, vector<256x128xf32>
    %cst = arith.constant dense<0.000000e+00> : vector<256x128xf32>
    %7 = tpu.matmul %4, %6, %cst {dimension_numbers = #tpu.dot_dimension_numbers<[1], [0], [0], [1], [0, 0, 1, 1], [], []>} : vector<256x256xf32>, vector<256x128xf32>, vector<256x128xf32> -> vector<256x128xf32>
    %8 = arith.addf %5, %7 : vector<256x128xf32>
    %c0_6 = arith.constant 0 : index
    %c0_7 = arith.constant 0 : index
    %9 = vector.load %arg12[%c0_6, %c0_7] : memref<256x128xf32, #tpu.memory_space<vmem>>, vector<256x128xf32>
    tpu.vector_store %arg12[%c0_6, %c0_7], %8 {strides = array<i32>} : memref<256x128xf32, #tpu.memory_space<vmem>>, vector<256x128xf32>,
    %c1_i32 = arith.constant 1 : i32
    %10 = arith.cmpi eq, %arg1, %c1_i32 : i32
    %11 = arith.extui %10 : i1 to i32
    %c0_i32_8 = arith.constant 0 : i32
    %12 = arith.cmpi ne, %11, %c0_i32_8 : i32
    scf.if %12 {
      %c0_9 = arith.constant 0 : index
      %c0_10 = arith.constant 0 : index
      %13 = vector.load %arg12[%c0_9, %c0_10] : memref<256x128xf32, #tpu.memory_space<vmem>>, vector<256x128xf32>
      %c0_11 = arith.constant 0 : index
      %c0_12 = arith.constant 0 : index
      %14 = vector.load %arg5[%c0_11, %c0_12] : memref<256x1xf32, #tpu.memory_space<vmem>>, vector<256x1xf32>
      %15 = vector.broadcast %14 : vector<256x1xf32> to vector<256x128xf32>
      %16 = arith.mulf %13, %15 : vector<256x128xf32>
      %c0_13 = arith.constant 0 : index
      %c0_14 = arith.constant 0 : index
      %17 = vector.load %arg4[%c0_13, %c0_14] : memref<256x128xf32, #tpu.memory_space<vmem>>, vector<256x128xf32>
      %18 = tpu.concatenate %17, %16 in 1 : vector<256x128xf32>, vector<256x128xf32> -> vector<256x256xf32>
      %c0_15 = arith.constant 0 : index
      %c0_16 = arith.constant 0 : index
      %19 = vector.load %arg6[%c0_15, %c0_16] : memref<256x128xf32, #tpu.memory_space<vmem>>, vector<256x128xf32>
      %cst_17 = arith.constant dense<0.000000e+00> : vector<256x128xf32>
      %20 = tpu.matmul %18, %19, %cst_17 {dimension_numbers = #tpu.dot_dimension_numbers<[1], [0], [0], [1], [0, 0, 1, 1], [], []>} : vector<256x256xf32>, vector<256x128xf32>, vector<256x128xf32> -> vector<256x128xf32>
      %c0_18 = arith.constant 0 : index
      %c0_19 = arith.constant 0 : index
      %21 = vector.load %arg7[%c0_18, %c0_19] : memref<1x128xf32, #tpu.memory_space<vmem>>, vector<1x128xf32>
      %22 = vector.broadcast %21 : vector<1x128xf32> to vector<256x128xf32>
      %23 = arith.addf %20, %22 : vector<256x128xf32>
      %cst_20 = arith.constant 0.000000e+00 : f32
      %24 = vector.broadcast %cst_20 : f32 to vector<256x128xf32>
      %25 = arith.maximumf %23, %24 : vector<256x128xf32>
      %c0_21 = arith.constant 0 : index
      %c0_22 = arith.constant 0 : index
      %26 = vector.load %arg10[%c0_21, %c0_22] : memref<256x128xf32, #tpu.memory_space<vmem>>, vector<256x128xf32>
      tpu.vector_store %arg10[%c0_21, %c0_22], %25 {strides = array<i32>} : memref<256x128xf32, #tpu.memory_space<vmem>>, vector<256x128xf32>,
      %c0_23 = arith.constant 0 : index
      %c0_24 = arith.constant 0 : index
      %27 = vector.load %arg8[%c0_23, %c0_24] : memref<128x128xf32, #tpu.memory_space<vmem>>, vector<128x128xf32>
      %cst_25 = arith.constant dense<0.000000e+00> : vector<256x128xf32>
      %28 = tpu.matmul %25, %27, %cst_25 {dimension_numbers = #tpu.dot_dimension_numbers<[1], [0], [0], [1], [0, 0, 1, 1], [], []>} : vector<256x128xf32>, vector<128x128xf32>, vector<256x128xf32> -> vector<256x128xf32>
      %c0_26 = arith.constant 0 : index
      %c0_27 = arith.constant 0 : index
      %29 = vector.load %arg9[%c0_26, %c0_27] : memref<1x128xf32, #tpu.memory_space<vmem>>, vector<1x128xf32>
      %30 = vector.broadcast %29 : vector<1x128xf32> to vector<256x128xf32>
      %31 = arith.addf %28, %30 : vector<256x128xf32>
      %c0_28 = arith.constant 0 : index
      %c0_29 = arith.constant 0 : index
      %32 = vector.load %arg11[%c0_28, %c0_29] : memref<256x128xf32, #tpu.memory_space<vmem>>, vector<256x128xf32>
      tpu.vector_store %arg11[%c0_28, %c0_29], %31 {strides = array<i32>} : memref<256x128xf32, #tpu.memory_space<vmem>>, vector<256x128xf32>,
    } else {
    }
    return
  }
  func.func @transform_0(%arg0: i32, %arg1: i32) -> (i32, i32) {
    %c0_i32 = arith.constant 0 : i32
    return %arg0, %arg1 : i32, i32
  }
  func.func @transform_1(%arg0: i32, %arg1: i32) -> (i32, i32) {
    %c0_i32 = arith.constant 0 : i32
    %c0_i32_0 = arith.constant 0 : i32
    return %arg1, %c0_i32 : i32, i32
  }
  func.func @transform_2(%arg0: i32, %arg1: i32) -> (i32, i32) {
    %c0_i32 = arith.constant 0 : i32
    %c0_i32_0 = arith.constant 0 : i32
    return %arg0, %c0_i32 : i32, i32
  }
  func.func @transform_3(%arg0: i32, %arg1: i32) -> (i32, i32) {
    %c0_i32 = arith.constant 0 : i32
    %c0_i32_0 = arith.constant 0 : i32
    return %arg0, %c0_i32 : i32, i32
  }
  func.func @transform_4(%arg0: i32, %arg1: i32) -> (i32, i32) {
    %c0_i32 = arith.constant 0 : i32
    %c0_i32_0 = arith.constant 0 : i32
    %c0_i32_1 = arith.constant 0 : i32
    return %c0_i32, %c0_i32_0 : i32, i32
  }
  func.func @transform_5(%arg0: i32, %arg1: i32) -> (i32, i32) {
    %c0_i32 = arith.constant 0 : i32
    %c0_i32_0 = arith.constant 0 : i32
    %c0_i32_1 = arith.constant 0 : i32
    return %c0_i32, %c0_i32_0 : i32, i32
  }
  func.func @transform_6(%arg0: i32, %arg1: i32) -> (i32, i32) {
    %c0_i32 = arith.constant 0 : i32
    %c0_i32_0 = arith.constant 0 : i32
    %c0_i32_1 = arith.constant 0 : i32
    return %c0_i32, %c0_i32_0 : i32, i32
  }
  func.func @transform_7(%arg0: i32, %arg1: i32) -> (i32, i32) {
    %c0_i32 = arith.constant 0 : i32
    %c0_i32_0 = arith.constant 0 : i32
    %c0_i32_1 = arith.constant 0 : i32
    return %c0_i32, %c0_i32_0 : i32, i32
  }
  func.func @transform_8(%arg0: i32, %arg1: i32) -> (i32, i32) {
    %c0_i32 = arith.constant 0 : i32
    %c0_i32_0 = arith.constant 0 : i32
    return %arg0, %c0_i32 : i32, i32
  }
  func.func @transform_9(%arg0: i32, %arg1: i32) -> (i32, i32) {
    %c0_i32 = arith.constant 0 : i32
    %c0_i32_0 = arith.constant 0 : i32
    return %arg0, %c0_i32 : i32, i32
  }
}

</mosaic_0001>

<llo_original>
// kernel: tpu_custom_call.1
$region0: #{tpu_custom_call.1}
  #allocation0 [shape = 'u32[]', space=smem, size = 0x4, offset = 0x4, fixed_abs, tag = 'smem constant byte address 0x4 - core index']
  #allocation1 [shape = 'u32[72,128]{1,0:T(1,128)}', space=vmem, size = 0x9000, scoped, tag = 'internal scratch']
  #allocation2 [shape = 'f32[256,128]{1,0:T(8,128)}', space=vmem, size = 0x20000, scoped, tag = 'scratch operand']
  %s0 = inlined_call_operand.hbm [shape: bf16[512,512], index: 0, kind: input, shape index: {}]
  %s1 = inlined_call_operand.vmem [shape: f32[512,128], index: 1, kind: input, shape index: {}]
  %s2 = inlined_call_operand.hbm [shape: f32[512,128], index: 2, kind: input, shape index: {}]
  %s3 = inlined_call_operand.vmem [shape: f32[512,1], index: 3, kind: input, shape index: {}]
  %s4 = inlined_call_operand.hbm [shape: f32[256,128], index: 4, kind: input, shape index: {}]
  %s5 = inlined_call_operand.vmem [shape: f32[1,128], index: 5, kind: input, shape index: {}]
  %s6 = inlined_call_operand.hbm [shape: f32[128,128], index: 6, kind: input, shape index: {}]
  %s7 = inlined_call_operand.vmem [shape: f32[1,128], index: 7, kind: input, shape index: {}]
  %s8 = inlined_call_operand.hbm [shape: f32[512,128], index: 8, kind: output, shape index: {0}]
  %s9 = inlined_call_operand.hbm [shape: f32[512,128], index: 9, kind: output, shape index: {1}]
  %10 = xla_tuple %s8, %s9
  %s11 = sld [smem:[#allocation0]]
  $region97: #{tpu_custom_call.1} parent=0
    _
  %s13 = ssub.s32 1, %s11
  %s14 = scalar_select 0, %s13, %s11
  $region1: #{tpu_custom_call.1} parent=0
    #allocation3 [shape = 'u8[262144]{0}', space=vmem, size = 0x40000, scoped, tag = 'input window, operand 0']
    #allocation4 [shape = 's32[2]{0}', space=sflag, size = 0x8, scoped, tag = 'scoped memory for tpu_custom_call.1']
    #allocation5 [shape = 's32[2]{0}', space=sflag, size = 0x8, scoped, tag = 'scoped memory for tpu_custom_call.1']
    #allocation6 [shape = 'u8[262144]{0}', space=vmem, size = 0x40000, scoped, tag = 'input window, operand 2']
    #allocation7 [shape = 's32[2]{0}', space=sflag, size = 0x8, scoped, tag = 'scoped memory for tpu_custom_call.1']
    #allocation8 [shape = 'u8[131072]{0}', space=vmem, size = 0x20000, scoped, tag = 'input window, operand 4, single buffered']
    #allocation9 [shape = 'u8[65536]{0}', space=vmem, size = 0x10000, scoped, tag = 'input window, operand 6, single buffered']
    #allocation10 [shape = 's32[1]{0}', space=sflag, size = 0x4, scoped, tag = 'scoped memory for tpu_custom_call.1']
    #allocation11 [shape = 'u8[262144]{0}', space=vmem, size = 0x40000, scoped, tag = 'output window, operand 0']
    #allocation12 [shape = 'u8[262144]{0}', space=vmem, size = 0x40000, scoped, tag = 'output window, operand 1']
    #allocation13 [shape = 's32[2]{0}', space=sflag, size = 0x8, scoped, tag = 'scoped memory for tpu_custom_call.1']
    %15 = vsyncpa [#allocation4], 0
    %s16 = scalar_lea.sflag [#allocation4], 1
    %17 = vsyncpa %s16, 0
    %18 = vsyncpa [#allocation7], 0
    %s19 = scalar_lea.sflag [#allocation7], 1
    %20 = vsyncpa %s19, 0
    %21 = vsyncpa [#allocation10], 0
    %22 = vsyncpa [#allocation5], 0
    %s23 = scalar_lea.sflag [#allocation5], 1
    %24 = vsyncpa %s23, 0
    %25 = vsyncpa [#allocation13], 0
    %s26 = scalar_lea.sflag [#allocation13], 1
    %27 = vsyncpa %s26, 0
    loop: start=0, step=1, limit=6
    $region2: #{tpu_custom_call.1} parent=1 // loop_pre_header
      _
    $region3: #{tpu_custom_call.1} parent=1 // loop_header
      %s29 = sphi 0, %s33
      %p30 = scmp.ge.s32.totalorder %s29, 6
      %s36 = sphi 0, %s48
      %s37 = sphi 0, %s44
      %s38 = sphi 0, %s36
      %s39 = sphi 0, %s37
      %s40 = sphi 0, %s38
      %s41 = sphi 0, %s39
      %s53 = sphi 0, %s55
      %s56 = sphi 0, %s53
      %s57 = sphi 0, %s56
      %s73 = sphi 0, %s57
      %s79 = sphi 0, %s81
      %s82 = sphi 0, %s79
      %s83 = sphi 0, %s82
      %s99 = sphi 0, %s83
      %s105 = sphi 0, %s107
      %s108 = sphi 0, %s105
      %s109 = sphi 0, %s108
      %s125 = sphi 0, %s109
      %s131 = sphi 0, %s133
      %s134 = sphi 0, %s131
      %s135 = sphi 0, %s134
      %s151 = sphi 0, %s135
      %s155 = sphi 0, %s155
      %s157 = sphi 0, %s155
      %s158 = sphi 0, %s157
      %s172 = sphi 0, %s158
      %s176 = sphi 0, %s176
      %s178 = sphi 0, %s176
      %s179 = sphi 0, %s178
      %s193 = sphi 0, %s179
      %s197 = sphi 0, %s197
      %s199 = sphi 0, %s197
      %s200 = sphi 0, %s199
      %s214 = sphi 0, %s200
      %s218 = sphi 0, %s218
      %s220 = sphi 0, %s218
      %s221 = sphi 0, %s220
      %s235 = sphi 0, %s221
      %s241 = sphi 0, %s243
      %s244 = sphi 0, %s241
      %s245 = sphi 0, %s244
      %s261 = sphi 0, %s245
      %s267 = sphi 0, %s269
      %s270 = sphi 0, %s267
      %s271 = sphi 0, %s270
      %s287 = sphi 0, %s271
    $region4: #{tpu_custom_call.1} parent=1 // loop_header_branch
      %32 = sbr.rel (%p30) target = $region8
    $region5: #{tpu_custom_call.1} parent=1 // loop_body
      %s34 = ssub.s32 %s29, 1
      %s35 = ssub.s32 %s29, 2
      %s42 = sadd.s32 1, %s37
      %p43 = scmp.ge.s32.totalorder %s42, 2
      %s44 = scalar_select %p43, 0, %s42
      %s45 = sadd.s32 1, %s36
      %s46 = scalar_select %p43, %s45, %s36
      %p47 = scmp.ge.s32.totalorder %s46, 2
      %s48 = scalar_select %p47, 0, %s46
      %s49 = ssub.s32 %s36, %s48
      %s50 = ssub.s32 %s37, %s44
      %s51 = sor.u32 %s49, %s50
      %p52 = scmp.eq.s32.totalorder %s51, 0
      %s54 = sadd.s32 %s53, 1
      %s55 = scalar_select %p52, %s53, %s54
      %p58 = pneg %p52
      %p59 = scmp.eq.s32.totalorder %s29, 3
      %p60 = por %p58, %p59
      %p61 = scmp.ne.s32.totalorder %s53, %s56
      %p62 = scmp.eq.s32.totalorder %s29, 0
      %p63 = por %p61, %p62
      %p64 = scmp.ne.s32.totalorder %s53, %s56
      %p65 = scmp.eq.s32.totalorder %s34, 3
      %p66 = por %p64, %p65
      %p67 = scmp.ne.s32.totalorder %s56, %s57
      %p68 = scmp.eq.s32.totalorder %s34, 0
      %p69 = por %p67, %p68
      %p70 = scmp.ne.s32.totalorder %s56, %s57
      %p71 = scmp.eq.s32.totalorder %s35, 3
      %p72 = por %p70, %p71
      %p74 = scmp.ne.s32.totalorder %s57, %s73
      %p75 = scmp.eq.s32.totalorder %s35, 0
      %p76 = por %p74, %p75
      %s77 = ssub.s32 %s37, %s44
      %p78 = scmp.eq.s32.totalorder %s77, 0
      %s80 = sadd.s32 %s79, 1
      %s81 = scalar_select %p78, %s79, %s80
      %p84 = pneg %p78
      %p85 = scmp.eq.s32.totalorder %s29, 3
      %p86 = por %p84, %p85
      %p87 = scmp.ne.s32.totalorder %s79, %s82
      %p88 = scmp.eq.s32.totalorder %s29, 0
      %p89 = por %p87, %p88
      %p90 = scmp.ne.s32.totalorder %s79, %s82
      %p91 = scmp.eq.s32.totalorder %s34, 3
      %p92 = por %p90, %p91
      %p93 = scmp.ne.s32.totalorder %s82, %s83
      %p94 = scmp.eq.s32.totalorder %s34, 0
      %p95 = por %p93, %p94
      %p96 = scmp.ne.s32.totalorder %s82, %s83
      %p97 = scmp.eq.s32.totalorder %s35, 3
      %p98 = por %p96, %p97
      %p100 = scmp.ne.s32.totalorder %s83, %s99
      %p101 = scmp.eq.s32.totalorder %s35, 0
      %p102 = por %p100, %p101
      %s103 = ssub.s32 %s36, %s48
      %p104 = scmp.eq.s32.totalorder %s103, 0
      %s106 = sadd.s32 %s105, 1
      %s107 = scalar_select %p104, %s105, %s106
      %p110 = pneg %p104
      %p111 = scmp.eq.s32.totalorder %s29, 3
      %p112 = por %p110, %p111
      %p113 = scmp.ne.s32.totalorder %s105, %s108
      %p114 = scmp.eq.s32.totalorder %s29, 0
      %p115 = por %p113, %p114
      %p116 = scmp.ne.s32.totalorder %s105, %s108
      %p117 = scmp.eq.s32.totalorder %s34, 3
      %p118 = por %p116, %p117
      %p119 = scmp.ne.s32.totalorder %s108, %s109
      %p120 = scmp.eq.s32.totalorder %s34, 0
      %p121 = por %p119, %p120
      %p122 = scmp.ne.s32.totalorder %s108, %s109
      %p123 = scmp.eq.s32.totalorder %s35, 3
      %p124 = por %p122, %p123
      %p126 = scmp.ne.s32.totalorder %s109, %s125
      %p127 = scmp.eq.s32.totalorder %s35, 0
      %p128 = por %p126, %p127
      %s129 = ssub.s32 %s36, %s48
      %p130 = scmp.eq.s32.totalorder %s129, 0
      %s132 = sadd.s32 %s131, 1
      %s133 = scalar_select %p130, %s131, %s132
      %p136 = pneg %p130
      %p137 = scmp.eq.s32.totalorder %s29, 3
      %p138 = por %p136, %p137
      %p139 = scmp.ne.s32.totalorder %s131, %s134
      %p140 = scmp.eq.s32.totalorder %s29, 0
      %p141 = por %p139, %p140
      %p142 = scmp.ne.s32.totalorder %s131, %s134
      %p143 = scmp.eq.s32.totalorder %s34, 3
      %p144 = por %p142, %p143
      %p145 = scmp.ne.s32.totalorder %s134, %s135
      %p146 = scmp.eq.s32.totalorder %s34, 0
      %p147 = por %p145, %p146
      %p148 = scmp.ne.s32.totalorder %s134, %s135
      %p149 = scmp.eq.s32.totalorder %s35, 3
      %p150 = por %p148, %p149
      %p152 = scmp.ne.s32.totalorder %s135, %s151
      %p153 = scmp.eq.s32.totalorder %s35, 0
      %p154 = por %p152, %p153
      %s156 = sadd.s32 %s155, 1
      %p159 = scmp.eq.s32.totalorder %s29, 3
      %p160 = scmp.ne.s32.totalorder %s155, %s157
      %p161 = scmp.eq.s32.totalorder %s29, 0
      %p162 = por %p160, %p161
      %p163 = scmp.ne.s32.totalorder %s155, %s157
      %p164 = scmp.eq.s32.totalorder %s34, 3
      %p165 = por %p163, %p164
      %p166 = scmp.ne.s32.totalorder %s157, %s158
      %p167 = scmp.eq.s32.totalorder %s34, 0
      %p168 = por %p166, %p167
      %p169 = scmp.ne.s32.totalorder %s157, %s158
      %p170 = scmp.eq.s32.totalorder %s35, 3
      %p171 = por %p169, %p170
      %p173 = scmp.ne.s32.totalorder %s158, %s172
      %p174 = scmp.eq.s32.totalorder %s35, 0
      %p175 = por %p173, %p174
      %s177 = sadd.s32 %s176, 1
      %p180 = scmp.eq.s32.totalorder %s29, 3
      %p181 = scmp.ne.s32.totalorder %s176, %s178
      %p182 = scmp.eq.s32.totalorder %s29, 0
      %p183 = por %p181, %p182
      %p184 = scmp.ne.s32.totalorder %s176, %s178
      %p185 = scmp.eq.s32.totalorder %s34, 3
      %p186 = por %p184, %p185
      %p187 = scmp.ne.s32.totalorder %s178, %s179
      %p188 = scmp.eq.s32.totalorder %s34, 0
      %p189 = por %p187, %p188
      %p190 = scmp.ne.s32.totalorder %s178, %s179
      %p191 = scmp.eq.s32.totalorder %s35, 3
      %p192 = por %p190, %p191
      %p194 = scmp.ne.s32.totalorder %s179, %s193
      %p195 = scmp.eq.s32.totalorder %s35, 0
      %p196 = por %p194, %p195
      %s198 = sadd.s32 %s197, 1
      %p201 = scmp.eq.s32.totalorder %s29, 3
      %p202 = scmp.ne.s32.totalorder %s197, %s199
      %p203 = scmp.eq.s32.totalorder %s29, 0
      %p204 = por %p202, %p203
      %p205 = scmp.ne.s32.totalorder %s197, %s199
      %p206 = scmp.eq.s32.totalorder %s34, 3
      %p207 = por %p205, %p206
      %p208 = scmp.ne.s32.totalorder %s199, %s200
      %p209 = scmp.eq.s32.totalorder %s34, 0
      %p210 = por %p208, %p209
      %p211 = scmp.ne.s32.totalorder %s199, %s200
      %p212 = scmp.eq.s32.totalorder %s35, 3
      %p213 = por %p211, %p212
      %p215 = scmp.ne.s32.totalorder %s200, %s214
      %p216 = scmp.eq.s32.totalorder %s35, 0
      %p217 = por %p215, %p216
      %s219 = sadd.s32 %s218, 1
      %p222 = scmp.eq.s32.totalorder %s29, 3
      %p223 = scmp.ne.s32.totalorder %s218, %s220
      %p224 = scmp.eq.s32.totalorder %s29, 0
      %p225 = por %p223, %p224
      %p226 = scmp.ne.s32.totalorder %s218, %s220
      %p227 = scmp.eq.s32.totalorder %s34, 3
      %p228 = por %p226, %p227
      %p229 = scmp.ne.s32.totalorder %s220, %s221
      %p230 = scmp.eq.s32.totalorder %s34, 0
      %p231 = por %p229, %p230
      %p232 = scmp.ne.s32.totalorder %s220, %s221
      %p233 = scmp.eq.s32.totalorder %s35, 3
      %p234 = por %p232, %p233
      %p236 = scmp.ne.s32.totalorder %s221, %s235
      %p237 = scmp.eq.s32.totalorder %s35, 0
      %p238 = por %p236, %p237
      %s239 = ssub.s32 %s36, %s48
      %p240 = scmp.eq.s32.totalorder %s239, 0
      %s242 = sadd.s32 %s241, 1
      %s243 = scalar_select %p240, %s241, %s242
      %p246 = pneg %p240
      %p247 = scmp.eq.s32.totalorder %s29, 3
      %p248 = por %p246, %p247
      %p249 = scmp.ne.s32.totalorder %s241, %s244
      %p250 = scmp.eq.s32.totalorder %s29, 0
      %p251 = por %p249, %p250
      %p252 = scmp.ne.s32.totalorder %s241, %s244
      %p253 = scmp.eq.s32.totalorder %s34, 3
      %p254 = por %p252, %p253
      %p255 = scmp.ne.s32.totalorder %s244, %s245
      %p256 = scmp.eq.s32.totalorder %s34, 0
      %p257 = por %p255, %p256
      %p258 = scmp.ne.s32.totalorder %s244, %s245
      %p259 = scmp.eq.s32.totalorder %s35, 3
      %p260 = por %p258, %p259
      %p262 = scmp.ne.s32.totalorder %s245, %s261
      %p263 = scmp.eq.s32.totalorder %s35, 0
      %p264 = por %p262, %p263
      %s265 = ssub.s32 %s36, %s48
      %p266 = scmp.eq.s32.totalorder %s265, 0
      %s268 = sadd.s32 %s267, 1
      %s269 = scalar_select %p266, %s267, %s268
      %p272 = pneg %p266
      %p273 = scmp.eq.s32.totalorder %s29, 3
      %p274 = por %p272, %p273
      %p275 = scmp.ne.s32.totalorder %s267, %s270
      %p276 = scmp.eq.s32.totalorder %s29, 0
      %p277 = por %p275, %p276
      %p278 = scmp.ne.s32.totalorder %s267, %s270
      %p279 = scmp.eq.s32.totalorder %s34, 3
      %p280 = por %p278, %p279
      %p281 = scmp.ne.s32.totalorder %s270, %s271
      %p282 = scmp.eq.s32.totalorder %s34, 0
      %p283 = por %p281, %p282
      %p284 = scmp.ne.s32.totalorder %s270, %s271
      %p285 = scmp.eq.s32.totalorder %s35, 3
      %p286 = por %p284, %p285
      %p288 = scmp.ne.s32.totalorder %s271, %s287
      %p289 = scmp.eq.s32.totalorder %s35, 0
      %p290 = por %p288, %p289
      %p291 = scmp.le.s32.totalorder 1, %s29
      %p292 = scmp.lt.s32.totalorder %s29, 5
      %p293 = pnand %p291, %p292
      %p294 = pneg %p293
      // Predicated region
      $region9: #{tpu_custom_call.1} parent=5 // pred_check
        _
      $region10: #{tpu_custom_call.1} parent=5 // pred_check_branch
        %296 = sbr.rel (%p293) target = $region12
      $region11: #{tpu_custom_call.1} parent=5 // pred_region
        %s297 = ssub.s32 %s29, 1
        // Predicated region
        $region13: #{tpu_custom_call.1} parent=11 // pred_check
          %p298 = pneg %p168
        $region14: #{tpu_custom_call.1} parent=11 // pred_check_branch
          %300 = sbr.rel (%p298) target = $region16
        $region15: #{tpu_custom_call.1} parent=11 // pred_region
          %302 = vsyncadd [#allocation7], 0
          %s303 = sshll.u32 %s4, 4
          %s304 = int_to_ptr.hbm [resolvable:$true] %s303
          %s305 = sshll.u32 [#allocation8], 4
          %s306 = int_to_ptr.vmem [resolvable:$true] %s305
          %311 = dma.hbm_to_vmem [thread:$0]  %s304, 4096, %s306, [#allocation7], 128, 128, 8
        $region16: #{tpu_custom_call.1} parent=11 // pred_fallthru
          _
        // Predicated region
        $region17: #{tpu_custom_call.1} parent=11 // pred_check
          %p312 = pneg %p189
        $region18: #{tpu_custom_call.1} parent=11 // pred_check_branch
          %314 = sbr.rel (%p312) target = $region20
        $region19: #{tpu_custom_call.1} parent=11 // pred_region
          _
        $region20: #{tpu_custom_call.1} parent=11 // pred_fallthru
          _
        // Predicated region
        $region21: #{tpu_custom_call.1} parent=11 // pred_check
          %p315 = pneg %p210
        $region22: #{tpu_custom_call.1} parent=11 // pred_check_branch
          %317 = sbr.rel (%p315) target = $region24
        $region23: #{tpu_custom_call.1} parent=11 // pred_region
          %319 = vsyncadd [#allocation10], 0
          %s320 = sshll.u32 %s6, 4
          %s321 = int_to_ptr.hbm [resolvable:$true] %s320
          %s322 = sshll.u32 [#allocation9], 4
          %s323 = int_to_ptr.vmem [resolvable:$true] %s322
          %328 = dma.hbm_to_vmem [thread:$0]  %s321, 2048, %s323, [#allocation10], 128, 128, 8
        $region24: #{tpu_custom_call.1} parent=11 // pred_fallthru
          _
        // Predicated region
        $region25: #{tpu_custom_call.1} parent=11 // pred_check
          %p329 = pneg %p231
        $region26: #{tpu_custom_call.1} parent=11 // pred_check_branch
          %331 = sbr.rel (%p329) target = $region28
        $region27: #{tpu_custom_call.1} parent=11 // pred_region
          _
        $region28: #{tpu_custom_call.1} parent=11 // pred_fallthru
          _
      $region12: #{tpu_custom_call.1} parent=5 // pred_fallthru
        _
      %p332 = scmp.lt.s32.totalorder %s29, 4
      // Predicated region
      $region29: #{tpu_custom_call.1} parent=5 // pred_check
        %p333 = pneg %p332
      $region30: #{tpu_custom_call.1} parent=5 // pred_check_branch
        %335 = sbr.rel (%p333) target = $region32
      $region31: #{tpu_custom_call.1} parent=5 // pred_region
        // Predicated region
        $region33: #{tpu_custom_call.1} parent=31 // pred_check
          %p336 = pneg %p63
        $region34: #{tpu_custom_call.1} parent=31 // pred_check_branch
          %338 = sbr.rel (%p336) target = $region36
        $region35: #{tpu_custom_call.1} parent=31 // pred_region
          %s339 = sand.u32 %s53, 1
          %s340 = scalar_lea.sflag [#allocation4], %s339
          %s341 = sand.u32 %s53, 1
          %s342 = smul.addr %s341, 256
          %s343 = scalar_lea.vmem [#allocation3], %s342
          %s344 = smul.u32 32, %s36
          %s345 = smul.u32 2, %s37
          %347 = vsyncadd %s340, 0
          %s348 = smul.addr %s344, 4
          %s349 = sadd.s32 %s345, %s348
          %s350 = smul.addr %s349, 4
          %s351 = scalar_lea.hbm %s0, %s350
          %s352 = sshll.u32 %s351, 4
          %s353 = int_to_ptr.hbm [resolvable:$true] %s352
          %s354 = sshll.u32 %s343, 4
          %s355 = int_to_ptr.vmem [resolvable:$true] %s354
          %360 = dma.hbm_to_vmem [thread:$0]  %s353, 4096, %s355, %s340, 256, 128, 8
        $region36: #{tpu_custom_call.1} parent=31 // pred_fallthru
          _
        // Predicated region
        $region37: #{tpu_custom_call.1} parent=31 // pred_check
          %p361 = pneg %p89
        $region38: #{tpu_custom_call.1} parent=31 // pred_check_branch
          %363 = sbr.rel (%p361) target = $region40
        $region39: #{tpu_custom_call.1} parent=31 // pred_region
          %s364 = smul.u32 32, %s37
          %p365 = scmp.lt.s32.totalorder %s364, 63
          %s366 = scalar_select %p365, %s364, 63
          %s367 = smul.addr %s366, 8
          %s368 = scalar_lea.vmem %s1, %s367
          %s369 = smul.u32 32, %s37
        $region40: #{tpu_custom_call.1} parent=31 // pred_fallthru
          _
        // Predicated region
        $region41: #{tpu_custom_call.1} parent=31 // pred_check
          %p370 = pneg %p115
        $region42: #{tpu_custom_call.1} parent=31 // pred_check_branch
          %372 = sbr.rel (%p370) target = $region44
        $region43: #{tpu_custom_call.1} parent=31 // pred_region
          %s373 = sand.u32 %s29, 1
          %s374 = scalar_lea.sflag [#allocation7], %s373
          %s375 = sand.u32 %s105, 1
          %s376 = smul.addr %s375, 256
          %s377 = scalar_lea.vmem [#allocation6], %s376
          %s378 = smul.u32 32, %s36
          %380 = vsyncadd %s374, 0
          %s381 = smul.addr %s378, 8
          %s382 = scalar_lea.hbm %s2, %s381
          %s383 = sshll.u32 %s382, 4
          %s384 = int_to_ptr.hbm [resolvable:$true] %s383
          %s385 = sshll.u32 %s377, 4
          %s386 = int_to_ptr.vmem [resolvable:$true] %s385
          %391 = dma.hbm_to_vmem [thread:$0]  %s384, 4096, %s386, %s374, 128, 128, 8
        $region44: #{tpu_custom_call.1} parent=31 // pred_fallthru
          _
        // Predicated region
        $region45: #{tpu_custom_call.1} parent=31 // pred_check
          %p392 = pneg %p141
        $region46: #{tpu_custom_call.1} parent=31 // pred_check_branch
          %394 = sbr.rel (%p392) target = $region48
        $region47: #{tpu_custom_call.1} parent=31 // pred_region
          %s395 = smul.u32 32, %s36
          %p396 = scmp.lt.s32.totalorder %s395, 63
          %s397 = scalar_select %p396, %s395, 63
          %s398 = smul.addr %s397, 8
          %s399 = scalar_lea.vmem %s3, %s398
          %s400 = smul.u32 32, %s36
        $region48: #{tpu_custom_call.1} parent=31 // pred_fallthru
          _
      $region32: #{tpu_custom_call.1} parent=5 // pred_fallthru
        _
      %p401 = scmp.le.s32.totalorder 1, %s29
      %p402 = scmp.lt.s32.totalorder %s29, 5
      %p403 = pnand %p401, %p402
      %p404 = pneg %p403
      // Predicated region
      $region49: #{tpu_custom_call.1} parent=5 // pred_check
        _
      $region50: #{tpu_custom_call.1} parent=5 // pred_check_branch
        %406 = sbr.rel (%p403) target = $region52
      $region51: #{tpu_custom_call.1} parent=5 // pred_region
        %s407 = ssub.s32 %s29, 1
        %s408 = sand.u32 %s56, 1
        %s409 = scalar_lea.sflag [#allocation4], %s408
        %s410 = sand.u32 %s56, 1
        %s411 = smul.addr %s410, 256
        %s412 = scalar_lea.vmem [#allocation3], %s411
        // Predicated region
        $region53: #{tpu_custom_call.1} parent=51 // pred_check
          %p413 = pneg %p69
        $region54: #{tpu_custom_call.1} parent=51 // pred_check_branch
          %415 = sbr.rel (%p413) target = $region56
        $region55: #{tpu_custom_call.1} parent=51 // pred_region
          %417 = dma.done %s409, 4096
        $region56: #{tpu_custom_call.1} parent=51 // pred_fallthru
          _
        %s418 = sand.u32 %s34, 1
        %s419 = scalar_lea.sflag [#allocation7], %s418
        %s420 = sand.u32 %s108, 1
        %s421 = smul.addr %s420, 256
        %s422 = scalar_lea.vmem [#allocation6], %s421
        // Predicated region
        $region57: #{tpu_custom_call.1} parent=51 // pred_check
          %p423 = pneg %p121
        $region58: #{tpu_custom_call.1} parent=51 // pred_check_branch
          %425 = sbr.rel (%p423) target = $region60
        $region59: #{tpu_custom_call.1} parent=51 // pred_region
          %427 = dma.done %s419, 4096
        $region60: #{tpu_custom_call.1} parent=51 // pred_fallthru
          _
        // Predicated region
        $region61: #{tpu_custom_call.1} parent=51 // pred_check
          %p428 = pneg %p168
        $region62: #{tpu_custom_call.1} parent=51 // pred_check_branch
          %430 = sbr.rel (%p428) target = $region64
        $region63: #{tpu_custom_call.1} parent=51 // pred_region
          %432 = dma.done [#allocation7], 4096
        $region64: #{tpu_custom_call.1} parent=51 // pred_fallthru
          _
        // Predicated region
        $region65: #{tpu_custom_call.1} parent=51 // pred_check
          %p433 = pneg %p210
        $region66: #{tpu_custom_call.1} parent=51 // pred_check_branch
          %435 = sbr.rel (%p433) target = $region68
        $region67: #{tpu_custom_call.1} parent=51 // pred_region
          %437 = dma.done [#allocation10], 2048
        $region68: #{tpu_custom_call.1} parent=51 // pred_fallthru
          _
        %s438 = sand.u32 %s56, 1
        %s439 = scalar_lea.sflag [#allocation4], %s438
        %s440 = sand.u32 %s56, 1
        %s441 = smul.addr %s440, 256
        %s442 = scalar_lea.vmem [#allocation3], %s441
        %p443 = pneg %p69
        %p444 = pneg %p66
        %s445 = smul.u32 32, %s39
        %p446 = scmp.lt.s32.totalorder %s445, 63
        %s447 = scalar_select %p446, %s445, 63
        %s448 = smul.addr %s447, 8
        %s449 = scalar_lea.vmem %s1, %s448
        %p450 = pneg %p95
        %p451 = pneg %p92
        %s452 = sand.u32 %s34, 1
        %s453 = scalar_lea.sflag [#allocation7], %s452
        %s454 = sand.u32 %s108, 1
        %s455 = smul.addr %s454, 256
        %s456 = scalar_lea.vmem [#allocation6], %s455
        %p457 = pneg %p121
        %p458 = pneg %p118
        %s459 = smul.u32 32, %s38
        %p460 = scmp.lt.s32.totalorder %s459, 63
        %s461 = scalar_select %p460, %s459, 63
        %s462 = smul.addr %s461, 8
        %s463 = scalar_lea.vmem %s3, %s462
        %p464 = pneg %p147
        %p465 = pneg %p144
        %p466 = pneg %p168
        %p467 = pneg %p165
        %p468 = pneg %p189
        %p469 = pneg %p186
        %p470 = pneg %p210
        %p471 = pneg %p207
        %p472 = pneg %p231
        %p473 = pneg %p228
        %p474 = pneg %p257
        %p475 = pneg %p254
        %s476 = sand.u32 %s244, 1
        %s477 = scalar_lea.sflag [#allocation5], %s476
        %s478 = sand.u32 %s244, 1
        %s479 = smul.addr %s478, 256
        %s480 = scalar_lea.vmem [#allocation11], %s479
        %p481 = pneg %p283
        %p482 = pneg %p280
        %s483 = sand.u32 %s270, 1
        %s484 = scalar_lea.sflag [#allocation13], %s483
        %s485 = sand.u32 %s270, 1
        %s486 = smul.addr %s485, 256
        %s487 = scalar_lea.vmem [#allocation12], %s486
        %s488 = smul.u32 32, %s38
        %s489 = smul.u32 2, %s39
        %s490 = smul.u32 32, %s39
        %p491 = scmp.lt.s32.totalorder %s490, 63
        %s492 = scalar_select %p491, %s490, 63
        %s493 = smul.addr %s492, 8
        %s494 = scalar_lea.vmem %s1, %s493
        %s495 = smul.u32 32, %s39
        %s496 = smul.u32 32, %s38
        %s497 = smul.u32 32, %s38
        %p498 = scmp.lt.s32.totalorder %s497, 63
        %s499 = scalar_select %p498, %s497, 63
        %s500 = smul.addr %s499, 8
        %s501 = scalar_lea.vmem %s3, %s500
        %s502 = smul.u32 32, %s38
        %s503 = smul.u32 32, %s38
        %s504 = smul.u32 32, %s38
        %p505 = scmp.eq.s32.totalorder %s39, 0
        // Predicated region
        $region69: #{tpu_custom_call.1} parent=51 // pred_check
          %p506 = pneg %p505
        $region70: #{tpu_custom_call.1} parent=51 // pred_check_branch
          %508 = sbr.rel (%p506) target = $region72
        $region71: #{tpu_custom_call.1} parent=51 // pred_region
          %509 = vst [vmem:[#allocation2] sm:$0xff] 0.0
          %510 = vst [vmem:[#allocation2 + $0x8] sm:$0xff] 0.0
          %511 = vst [vmem:[#allocation2 + $0x10] sm:$0xff] 0.0
          %512 = vst [vmem:[#allocation2 + $0x18] sm:$0xff] 0.0
          %513 = vst [vmem:[#allocation2 + $0x20] sm:$0xff] 0.0
          %514 = vst [vmem:[#allocation2 + $0x28] sm:$0xff] 0.0
          %515 = vst [vmem:[#allocation2 + $0x30] sm:$0xff] 0.0
          %516 = vst [vmem:[#allocation2 + $0x38] sm:$0xff] 0.0
          %517 = vst [vmem:[#allocation2 + $0x40] sm:$0xff] 0.0
          %518 = vst [vmem:[#allocation2 + $0x48] sm:$0xff] 0.0
          %519 = vst [vmem:[#allocation2 + $0x50] sm:$0xff] 0.0
          %520 = vst [vmem:[#allocation2 + $0x58] sm:$0xff] 0.0
          %521 = vst [vmem:[#allocation2 + $0x60] sm:$0xff] 0.0
          %522 = vst [vmem:[#allocation2 + $0x68] sm:$0xff] 0.0
          %523 = vst [vmem:[#allocation2 + $0x70] sm:$0xff] 0.0
          %524 = vst [vmem:[#allocation2 + $0x78] sm:$0xff] 0.0
          %525 = vst [vmem:[#allocation2 + $0x80] sm:$0xff] 0.0
          %526 = vst [vmem:[#allocation2 + $0x88] sm:$0xff] 0.0
          %527 = vst [vmem:[#allocation2 + $0x90] sm:$0xff] 0.0
          %528 = vst [vmem:[#allocation2 + $0x98] sm:$0xff] 0.0
          %529 = vst [vmem:[#allocation2 + $0xa0] sm:$0xff] 0.0
          %530 = vst [vmem:[#allocation2 + $0xa8] sm:$0xff] 0.0
          %531 = vst [vmem:[#allocation2 + $0xb0] sm:$0xff] 0.0
          %532 = vst [vmem:[#allocation2 + $0xb8] sm:$0xff] 0.0
          %533 = vst [vmem:[#allocation2 + $0xc0] sm:$0xff] 0.0
          %534 = vst [vmem:[#allocation2 + $0xc8] sm:$0xff] 0.0
          %535 = vst [vmem:[#allocation2 + $0xd0] sm:$0xff] 0.0
          %536 = vst [vmem:[#allocation2 + $0xd8] sm:$0xff] 0.0
          %537 = vst [vmem:[#allocation2 + $0xe0] sm:$0xff] 0.0
          %538 = vst [vmem:[#allocation2 + $0xe8] sm:$0xff] 0.0
          %539 = vst [vmem:[#allocation2 + $0xf0] sm:$0xff] 0.0
          %540 = vst [vmem:[#allocation2 + $0xf8] sm:$0xff] 0.0
        $region72: #{tpu_custom_call.1} parent=51 // pred_fallthru
          _
        %v541 = vld [vmem:[%s412] sm:$0xff]
        %v542 = vld [vmem:[%s412 + $0x8] sm:$0xff]
        %v543 = vld [vmem:[%s412 + $0x10] sm:$0xff]
        %v544 = vld [vmem:[%s412 + $0x18] sm:$0xff]
        %v545 = vld [vmem:[%s412 + $0x20] sm:$0xff]
        %v546 = vld [vmem:[%s412 + $0x28] sm:$0xff]
        %v547 = vld [vmem:[%s412 + $0x30] sm:$0xff]
        %v548 = vld [vmem:[%s412 + $0x38] sm:$0xff]
        %v549 = vld [vmem:[%s412 + $0x40] sm:$0xff]
        %v550 = vld [vmem:[%s412 + $0x48] sm:$0xff]
        %v551 = vld [vmem:[%s412 + $0x50] sm:$0xff]
        %v552 = vld [vmem:[%s412 + $0x58] sm:$0xff]
        %v553 = vld [vmem:[%s412 + $0x60] sm:$0xff]
        %v554 = vld [vmem:[%s412 + $0x68] sm:$0xff]
        %v555 = vld [vmem:[%s412 + $0x70] sm:$0xff]
        %v556 = vld [vmem:[%s412 + $0x78] sm:$0xff]
        %v557 = vld [vmem:[%s412 + $0x80] sm:$0xff]
        %v558 = vld [vmem:[%s412 + $0x88] sm:$0xff]
        %v559 = vld [vmem:[%s412 + $0x90] sm:$0xff]
        %v560 = vld [vmem:[%s412 + $0x98] sm:$0xff]
        %v561 = vld [vmem:[%s412 + $0xa0] sm:$0xff]
        %v562 = vld [vmem:[%s412 + $0xa8] sm:$0xff]
        %v563 = vld [vmem:[%s412 + $0xb0] sm:$0xff]
        %v564 = vld [vmem:[%s412 + $0xb8] sm:$0xff]
        %v565 = vld [vmem:[%s412 + $0xc0] sm:$0xff]
        %v566 = vld [vmem:[%s412 + $0xc8] sm:$0xff]
        %v567 = vld [vmem:[%s412 + $0xd0] sm:$0xff]
        %v568 = vld [vmem:[%s412 + $0xd8] sm:$0xff]
        %v569 = vld [vmem:[%s412 + $0xe0] sm:$0xff]
        %v570 = vld [vmem:[%s412 + $0xe8] sm:$0xff]
        %v571 = vld [vmem:[%s412 + $0xf0] sm:$0xff]
        %v572 = vld [vmem:[%s412 + $0xf8] sm:$0xff]
        %v573 = vunpack.c.l.bf16 %v541
        %v574 = vunpack.c.h.bf16 %v541
        %v575 = vunpack.c.l.bf16 %v542
        %v576 = vunpack.c.h.bf16 %v542
        %v577 = vunpack.c.l.bf16 %v543
        %v578 = vunpack.c.h.bf16 %v543
        %v579 = vunpack.c.l.bf16 %v544
        %v580 = vunpack.c.h.bf16 %v544
        %v581 = vunpack.c.l.bf16 %v545
        %v582 = vunpack.c.h.bf16 %v545
        %v583 = vunpack.c.l.bf16 %v546
        %v584 = vunpack.c.h.bf16 %v546
        %v585 = vunpack.c.l.bf16 %v547
        %v586 = vunpack.c.h.bf16 %v547
        %v587 = vunpack.c.l.bf16 %v548
        %v588 = vunpack.c.h.bf16 %v548
        %v589 = vunpack.c.l.bf16 %v549
        %v590 = vunpack.c.h.bf16 %v549
        %v591 = vunpack.c.l.bf16 %v550
        %v592 = vunpack.c.h.bf16 %v550
        %v593 = vunpack.c.l.bf16 %v551
        %v594 = vunpack.c.h.bf16 %v551
        %v595 = vunpack.c.l.bf16 %v552
        %v596 = vunpack.c.h.bf16 %v552
        %v597 = vunpack.c.l.bf16 %v553
        %v598 = vunpack.c.h.bf16 %v553
        %v599 = vunpack.c.l.bf16 %v554
        %v600 = vunpack.c.h.bf16 %v554
        %v601 = vunpack.c.l.bf16 %v555
        %v602 = vunpack.c.h.bf16 %v555
        %v603 = vunpack.c.l.bf16 %v556
        %v604 = vunpack.c.h.bf16 %v556
        %v605 = vunpack.c.l.bf16 %v557
        %v606 = vunpack.c.h.bf16 %v557
        %v607 = vunpack.c.l.bf16 %v558
        %v608 = vunpack.c.h.bf16 %v558
        %v609 = vunpack.c.l.bf16 %v559
        %v610 = vunpack.c.h.bf16 %v559
        %v611 = vunpack.c.l.bf16 %v560
        %v612 = vunpack.c.h.bf16 %v560
        %v613 = vunpack.c.l.bf16 %v561
        %v614 = vunpack.c.h.bf16 %v561
        %v615 = vunpack.c.l.bf16 %v562
        %v616 = vunpack.c.h.bf16 %v562
        %v617 = vunpack.c.l.bf16 %v563
        %v618 = vunpack.c.h.bf16 %v563
        %v619 = vunpack.c.l.bf16 %v564
        %v620 = vunpack.c.h.bf16 %v564
        %v621 = vunpack.c.l.bf16 %v565
        %v622 = vunpack.c.h.bf16 %v565
        %v623 = vunpack.c.l.bf16 %v566
        %v624 = vunpack.c.h.bf16 %v566
        %v625 = vunpack.c.l.bf16 %v567
        %v626 = vunpack.c.h.bf16 %v567
        %v627 = vunpack.c.l.bf16 %v568
        %v628 = vunpack.c.h.bf16 %v568
        %v629 = vunpack.c.l.bf16 %v569
        %v630 = vunpack.c.h.bf16 %v569
        %v631 = vunpack.c.l.bf16 %v570
        %v632 = vunpack.c.h.bf16 %v570
        %v633 = vunpack.c.l.bf16 %v571
        %v634 = vunpack.c.h.bf16 %v571
        %v635 = vunpack.c.l.bf16 %v572
        %v636 = vunpack.c.h.bf16 %v572
        %v637 = vld [vmem:[#allocation2] sm:$0xff]
        %v638 = vld [vmem:[#allocation2 + $0x8] sm:$0xff]
        %v639 = vld [vmem:[#allocation2 + $0x10] sm:$0xff]
        %v640 = vld [vmem:[#allocation2 + $0x18] sm:$0xff]
        %v641 = vld [vmem:[#allocation2 + $0x20] sm:$0xff]
        %v642 = vld [vmem:[#allocation2 + $0x28] sm:$0xff]
        %v643 = vld [vmem:[#allocation2 + $0x30] sm:$0xff]
        %v644 = vld [vmem:[#allocation2 + $0x38] sm:$0xff]
        %v645 = vld [vmem:[#allocation2 + $0x40] sm:$0xff]
        %v646 = vld [vmem:[#allocation2 + $0x48] sm:$0xff]
        %v647 = vld [vmem:[#allocation2 + $0x50] sm:$0xff]
        %v648 = vld [vmem:[#allocation2 + $0x58] sm:$0xff]
        %v649 = vld [vmem:[#allocation2 + $0x60] sm:$0xff]
        %v650 = vld [vmem:[#allocation2 + $0x68] sm:$0xff]
        %v651 = vld [vmem:[#allocation2 + $0x70] sm:$0xff]
        %v652 = vld [vmem:[#allocation2 + $0x78] sm:$0xff]
        %v653 = vld [vmem:[#allocation2 + $0x80] sm:$0xff]
        %v654 = vld [vmem:[#allocation2 + $0x88] sm:$0xff]
        %v655 = vld [vmem:[#allocation2 + $0x90] sm:$0xff]
        %v656 = vld [vmem:[#allocation2 + $0x98] sm:$0xff]
        %v657 = vld [vmem:[#allocation2 + $0xa0] sm:$0xff]
        %v658 = vld [vmem:[#allocation2 + $0xa8] sm:$0xff]
        %v659 = vld [vmem:[#allocation2 + $0xb0] sm:$0xff]
        %v660 = vld [vmem:[#allocation2 + $0xb8] sm:$0xff]
        %v661 = vld [vmem:[#allocation2 + $0xc0] sm:$0xff]
        %v662 = vld [vmem:[#allocation2 + $0xc8] sm:$0xff]
        %v663 = vld [vmem:[#allocation2 + $0xd0] sm:$0xff]
        %v664 = vld [vmem:[#allocation2 + $0xd8] sm:$0xff]
        %v665 = vld [vmem:[#allocation2 + $0xe0] sm:$0xff]
        %v666 = vld [vmem:[#allocation2 + $0xe8] sm:$0xff]
        %v667 = vld [vmem:[#allocation2 + $0xf0] sm:$0xff]
        %v668 = vld [vmem:[#allocation2 + $0xf8] sm:$0xff]
        %v669 = vld [vmem:[%s494] sm:$0xff]
        %v670 = vld [vmem:[%s494 + $0x8] sm:$0xff]
        %v671 = vld [vmem:[%s494 + $0x10] sm:$0xff]
        %v672 = vld [vmem:[%s494 + $0x18] sm:$0xff]
        %v673 = vld [vmem:[%s494 + $0x20] sm:$0xff]
        %v674 = vld [vmem:[%s494 + $0x28] sm:$0xff]
        %v675 = vld [vmem:[%s494 + $0x30] sm:$0xff]
        %v676 = vld [vmem:[%s494 + $0x38] sm:$0xff]
        %v677 = vld [vmem:[%s494 + $0x40] sm:$0xff]
        %v678 = vld [vmem:[%s494 + $0x48] sm:$0xff]
        %v679 = vld [vmem:[%s494 + $0x50] sm:$0xff]
        %v680 = vld [vmem:[%s494 + $0x58] sm:$0xff]
        %v681 = vld [vmem:[%s494 + $0x60] sm:$0xff]
        %v682 = vld [vmem:[%s494 + $0x68] sm:$0xff]
        %v683 = vld [vmem:[%s494 + $0x70] sm:$0xff]
        %v684 = vld [vmem:[%s494 + $0x78] sm:$0xff]
        %v685 = vld [vmem:[%s494 + $0x80] sm:$0xff]
        %v686 = vld [vmem:[%s494 + $0x88] sm:$0xff]
        %v687 = vld [vmem:[%s494 + $0x90] sm:$0xff]
        %v688 = vld [vmem:[%s494 + $0x98] sm:$0xff]
        %v689 = vld [vmem:[%s494 + $0xa0] sm:$0xff]
        %v690 = vld [vmem:[%s494 + $0xa8] sm:$0xff]
        %v691 = vld [vmem:[%s494 + $0xb0] sm:$0xff]
        %v692 = vld [vmem:[%s494 + $0xb8] sm:$0xff]
        %v693 = vld [vmem:[%s494 + $0xc0] sm:$0xff]
        %v694 = vld [vmem:[%s494 + $0xc8] sm:$0xff]
        %v695 = vld [vmem:[%s494 + $0xd0] sm:$0xff]
        %v696 = vld [vmem:[%s494 + $0xd8] sm:$0xff]
        %v697 = vld [vmem:[%s494 + $0xe0] sm:$0xff]
        %v698 = vld [vmem:[%s494 + $0xe8] sm:$0xff]
        %v699 = vld [vmem:[%s494 + $0xf0] sm:$0xff]
        %v700 = vld [vmem:[%s494 + $0xf8] sm:$0xff]
        %701 = vmatpush.msra.mxu0 %v684
        %702 = vmatpush.msra.mxu0 %v683
        %703 = vmatpush.msra.mxu0 %v682
        %704 = vmatpush.msra.mxu0 %v681
        %705 = vmatpush.msra.mxu0 %v680
        %706 = vmatpush.msra.mxu0 %v679
        %707 = vmatpush.msra.mxu0 %v678
        %708 = vmatpush.msra.mxu0 %v677
        %709 = vmatpush.msra.mxu0 %v676
        %710 = vmatpush.msra.mxu0 %v675
        %711 = vmatpush.msra.mxu0 %v674
        %712 = vmatpush.msra.mxu0 %v673
        %713 = vmatpush.msra.mxu0 %v672
        %714 = vmatpush.msra.mxu0 %v671
        %715 = vmatpush.msra.mxu0 %v670
        %716 = vmatpush.msra.mxu0 %v669
        %717 = vmatmul.f32.gmra.mxu0 %v573
        %v718 = vpop.f32.mrf.mxu0
        %v719 = vadd.f32 0.0, %v718
        %720 = vmatmul.f32.gmra.mxu0 %v575
        %v721 = vpop.f32.mrf.mxu0
        %v722 = vadd.f32 0.0, %v721
        %723 = vmatmul.f32.gmra.mxu0 %v577
        %v724 = vpop.f32.mrf.mxu0
        %v725 = vadd.f32 0.0, %v724
        %726 = vmatmul.f32.gmra.mxu0 %v579
        %v727 = vpop.f32.mrf.mxu0
        %v728 = vadd.f32 0.0, %v727
        %729 = vmatmul.f32.gmra.mxu0 %v581
        %v730 = vpop.f32.mrf.mxu0
        %v731 = vadd.f32 0.0, %v730
        %732 = vmatmul.f32.gmra.mxu0 %v583
        %v733 = vpop.f32.mrf.mxu0
        %v734 = vadd.f32 0.0, %v733
        %735 = vmatmul.f32.gmra.mxu0 %v585
        %v736 = vpop.f32.mrf.mxu0
        %v737 = vadd.f32 0.0, %v736
        %738 = vmatmul.f32.gmra.mxu0 %v587
        %v739 = vpop.f32.mrf.mxu0
        %v740 = vadd.f32 0.0, %v739
        %741 = vmatmul.f32.gmra.mxu0 %v589
        %v742 = vpop.f32.mrf.mxu0
        %v743 = vadd.f32 0.0, %v742
        %744 = vmatmul.f32.gmra.mxu0 %v591
        %v745 = vpop.f32.mrf.mxu0
        %v746 = vadd.f32 0.0, %v745
        %747 = vmatmul.f32.gmra.mxu0 %v593
        %v748 = vpop.f32.mrf.mxu0
        %v749 = vadd.f32 0.0, %v748
        %750 = vmatmul.f32.gmra.mxu0 %v595
        %v751 = vpop.f32.mrf.mxu0
        %v752 = vadd.f32 0.0, %v751
        %753 = vmatmul.f32.gmra.mxu0 %v597
        %v754 = vpop.f32.mrf.mxu0
        %v755 = vadd.f32 0.0, %v754
        %756 = vmatmul.f32.gmra.mxu0 %v599
        %v757 = vpop.f32.mrf.mxu0
        %v758 = vadd.f32 0.0, %v757
        %759 = vmatmul.f32.gmra.mxu0 %v601
        %v760 = vpop.f32.mrf.mxu0
        %v761 = vadd.f32 0.0, %v760
        %762 = vmatmul.f32.gmra.mxu0 %v603
        %v763 = vpop.f32.mrf.mxu0
        %v764 = vadd.f32 0.0, %v763
        %765 = vmatmul.f32.gmra.mxu0 %v605
        %v766 = vpop.f32.mrf.mxu0
        %v767 = vadd.f32 0.0, %v766
        %768 = vmatmul.f32.gmra.mxu0 %v607
        %v769 = vpop.f32.mrf.mxu0
        %v770 = vadd.f32 0.0, %v769
        %771 = vmatmul.f32.gmra.mxu0 %v609
        %v772 = vpop.f32.mrf.mxu0
        %v773 = vadd.f32 0.0, %v772
        %774 = vmatmul.f32.gmra.mxu0 %v611
        %v775 = vpop.f32.mrf.mxu0
        %v776 = vadd.f32 0.0, %v775
        %777 = vmatmul.f32.gmra.mxu0 %v613
        %v778 = vpop.f32.mrf.mxu0
        %v779 = vadd.f32 0.0, %v778
        %780 = vmatmul.f32.gmra.mxu0 %v615
        %v781 = vpop.f32.mrf.mxu0
        %v782 = vadd.f32 0.0, %v781
        %783 = vmatmul.f32.gmra.mxu0 %v617
        %v784 = vpop.f32.mrf.mxu0
        %v785 = vadd.f32 0.0, %v784
        %786 = vmatmul.f32.gmra.mxu0 %v619
        %v787 = vpop.f32.mrf.mxu0
        %v788 = vadd.f32 0.0, %v787
        %789 = vmatmul.f32.gmra.mxu0 %v621
        %v790 = vpop.f32.mrf.mxu0
        %v791 = vadd.f32 0.0, %v790
        %792 = vmatmul.f32.gmra.mxu0 %v623
        %v793 = vpop.f32.mrf.mxu0
        %v794 = vadd.f32 0.0, %v793
        %795 = vmatmul.f32.gmra.mxu0 %v625
        %v796 = vpop.f32.mrf.mxu0
        %v797 = vadd.f32 0.0, %v796
        %798 = vmatmul.f32.gmra.mxu0 %v627
        %v799 = vpop.f32.mrf.mxu0
        %v800 = vadd.f32 0.0, %v799
        %801 = vmatmul.f32.gmra.mxu0 %v629
        %v802 = vpop.f32.mrf.mxu0
        %v803 = vadd.f32 0.0, %v802
        %804 = vmatmul.f32.gmra.mxu0 %v631
        %v805 = vpop.f32.mrf.mxu0
        %v806 = vadd.f32 0.0, %v805
        %807 = vmatmul.f32.gmra.mxu0 %v633
        %v808 = vpop.f32.mrf.mxu0
        %v809 = vadd.f32 0.0, %v808
        %810 = vmatmul.f32.gmra.mxu0 %v635
        %v811 = vpop.f32.mrf.mxu0
        %v812 = vadd.f32 0.0, %v811
        %813 = vdwg.mxu0
        %814 = vmatpush.msra.mxu0 %v700
        %815 = vmatpush.msra.mxu0 %v699
        %816 = vmatpush.msra.mxu0 %v698
        %817 = vmatpush.msra.mxu0 %v697
        %818 = vmatpush.msra.mxu0 %v696
        %819 = vmatpush.msra.mxu0 %v695
        %820 = vmatpush.msra.mxu0 %v694
        %821 = vmatpush.msra.mxu0 %v693
        %822 = vmatpush.msra.mxu0 %v692
        %823 = vmatpush.msra.mxu0 %v691
        %824 = vmatpush.msra.mxu0 %v690
        %825 = vmatpush.msra.mxu0 %v689
        %826 = vmatpush.msra.mxu0 %v688
        %827 = vmatpush.msra.mxu0 %v687
        %828 = vmatpush.msra.mxu0 %v686
        %829 = vmatpush.msra.mxu0 %v685
        %830 = vmatmul.f32.gmra.mxu0 %v574
        %v831 = vpop.f32.mrf.mxu0
        %v832 = vadd.f32 %v719, %v831
        %833 = vmatmul.f32.gmra.mxu0 %v576
        %v834 = vpop.f32.mrf.mxu0
        %v835 = vadd.f32 %v722, %v834
        %836 = vmatmul.f32.gmra.mxu0 %v578
        %v837 = vpop.f32.mrf.mxu0
        %v838 = vadd.f32 %v725, %v837
        %839 = vmatmul.f32.gmra.mxu0 %v580
        %v840 = vpop.f32.mrf.mxu0
        %v841 = vadd.f32 %v728, %v840
        %842 = vmatmul.f32.gmra.mxu0 %v582
        %v843 = vpop.f32.mrf.mxu0
        %v844 = vadd.f32 %v731, %v843
        %845 = vmatmul.f32.gmra.mxu0 %v584
        %v846 = vpop.f32.mrf.mxu0
        %v847 = vadd.f32 %v734, %v846
        %848 = vmatmul.f32.gmra.mxu0 %v586
        %v849 = vpop.f32.mrf.mxu0
        %v850 = vadd.f32 %v737, %v849
        %851 = vmatmul.f32.gmra.mxu0 %v588
        %v852 = vpop.f32.mrf.mxu0
        %v853 = vadd.f32 %v740, %v852
        %854 = vmatmul.f32.gmra.mxu0 %v590
        %v855 = vpop.f32.mrf.mxu0
        %v856 = vadd.f32 %v743, %v855
        %857 = vmatmul.f32.gmra.mxu0 %v592
        %v858 = vpop.f32.mrf.mxu0
        %v859 = vadd.f32 %v746, %v858
        %860 = vmatmul.f32.gmra.mxu0 %v594
        %v861 = vpop.f32.mrf.mxu0
        %v862 = vadd.f32 %v749, %v861
        %863 = vmatmul.f32.gmra.mxu0 %v596
        %v864 = vpop.f32.mrf.mxu0
        %v865 = vadd.f32 %v752, %v864
        %866 = vmatmul.f32.gmra.mxu0 %v598
        %v867 = vpop.f32.mrf.mxu0
        %v868 = vadd.f32 %v755, %v867
        %869 = vmatmul.f32.gmra.mxu0 %v600
        %v870 = vpop.f32.mrf.mxu0
        %v871 = vadd.f32 %v758, %v870
        %872 = vmatmul.f32.gmra.mxu0 %v602
        %v873 = vpop.f32.mrf.mxu0
        %v874 = vadd.f32 %v761, %v873
        %875 = vmatmul.f32.gmra.mxu0 %v604
        %v876 = vpop.f32.mrf.mxu0
        %v877 = vadd.f32 %v764, %v876
        %878 = vmatmul.f32.gmra.mxu0 %v606
        %v879 = vpop.f32.mrf.mxu0
        %v880 = vadd.f32 %v767, %v879
        %881 = vmatmul.f32.gmra.mxu0 %v608
        %v882 = vpop.f32.mrf.mxu0
        %v883 = vadd.f32 %v770, %v882
        %884 = vmatmul.f32.gmra.mxu0 %v610
        %v885 = vpop.f32.mrf.mxu0
        %v886 = vadd.f32 %v773, %v885
        %887 = vmatmul.f32.gmra.mxu0 %v612
        %v888 = vpop.f32.mrf.mxu0
        %v889 = vadd.f32 %v776, %v888
        %890 = vmatmul.f32.gmra.mxu0 %v614
        %v891 = vpop.f32.mrf.mxu0
        %v892 = vadd.f32 %v779, %v891
        %893 = vmatmul.f32.gmra.mxu0 %v616
        %v894 = vpop.f32.mrf.mxu0
        %v895 = vadd.f32 %v782, %v894
        %896 = vmatmul.f32.gmra.mxu0 %v618
        %v897 = vpop.f32.mrf.mxu0
        %v898 = vadd.f32 %v785, %v897
        %899 = vmatmul.f32.gmra.mxu0 %v620
        %v900 = vpop.f32.mrf.mxu0
        %v901 = vadd.f32 %v788, %v900
        %902 = vmatmul.f32.gmra.mxu0 %v622
        %v903 = vpop.f32.mrf.mxu0
        %v904 = vadd.f32 %v791, %v903
        %905 = vmatmul.f32.gmra.mxu0 %v624
        %v906 = vpop.f32.mrf.mxu0
        %v907 = vadd.f32 %v794, %v906
        %908 = vmatmul.f32.gmra.mxu0 %v626
        %v909 = vpop.f32.mrf.mxu0
        %v910 = vadd.f32 %v797, %v909
        %911 = vmatmul.f32.gmra.mxu0 %v628
        %v912 = vpop.f32.mrf.mxu0
        %v913 = vadd.f32 %v800, %v912
        %914 = vmatmul.f32.gmra.mxu0 %v630
        %v915 = vpop.f32.mrf.mxu0
        %v916 = vadd.f32 %v803, %v915
        %917 = vmatmul.f32.gmra.mxu0 %v632
        %v918 = vpop.f32.mrf.mxu0
        %v919 = vadd.f32 %v806, %v918
        %920 = vmatmul.f32.gmra.mxu0 %v634
        %v921 = vpop.f32.mrf.mxu0
        %v922 = vadd.f32 %v809, %v921
        %923 = vmatmul.f32.gmra.mxu0 %v636
        %v924 = vpop.f32.mrf.mxu0
        %v925 = vadd.f32 %v812, %v924
        %926 = vdwg.mxu0
        %v927 = vadd.f32 %v637, %v832
        %v928 = vadd.f32 %v638, %v835
        %v929 = vadd.f32 %v639, %v838
        %v930 = vadd.f32 %v640, %v841
        %v931 = vadd.f32 %v641, %v844
        %v932 = vadd.f32 %v642, %v847
        %v933 = vadd.f32 %v643, %v850
        %v934 = vadd.f32 %v644, %v853
        %v935 = vadd.f32 %v645, %v856
        %v936 = vadd.f32 %v646, %v859
        %v937 = vadd.f32 %v647, %v862
        %v938 = vadd.f32 %v648, %v865
        %v939 = vadd.f32 %v649, %v868
        %v940 = vadd.f32 %v650, %v871
        %v941 = vadd.f32 %v651, %v874
        %v942 = vadd.f32 %v652, %v877
        %v943 = vadd.f32 %v653, %v880
        %v944 = vadd.f32 %v654, %v883
        %v945 = vadd.f32 %v655, %v886
        %v946 = vadd.f32 %v656, %v889
        %v947 = vadd.f32 %v657, %v892
        %v948 = vadd.f32 %v658, %v895
        %v949 = vadd.f32 %v659, %v898
        %v950 = vadd.f32 %v660, %v901
        %v951 = vadd.f32 %v661, %v904
        %v952 = vadd.f32 %v662, %v907
        %v953 = vadd.f32 %v663, %v910
        %v954 = vadd.f32 %v664, %v913
        %v955 = vadd.f32 %v665, %v916
        %v956 = vadd.f32 %v666, %v919
        %v957 = vadd.f32 %v667, %v922
        %v958 = vadd.f32 %v668, %v925
        %959 = vst [vmem:[#allocation2] sm:$0xff] %v927
        %960 = vst [vmem:[#allocation2 + $0x8] sm:$0xff] %v928
        %961 = vst [vmem:[#allocation2 + $0x10] sm:$0xff] %v929
        %962 = vst [vmem:[#allocation2 + $0x18] sm:$0xff] %v930
        %963 = vst [vmem:[#allocation2 + $0x20] sm:$0xff] %v931
        %964 = vst [vmem:[#allocation2 + $0x28] sm:$0xff] %v932
        %965 = vst [vmem:[#allocation2 + $0x30] sm:$0xff] %v933
        %966 = vst [vmem:[#allocation2 + $0x38] sm:$0xff] %v934
        %967 = vst [vmem:[#allocation2 + $0x40] sm:$0xff] %v935
        %968 = vst [vmem:[#allocation2 + $0x48] sm:$0xff] %v936
        %969 = vst [vmem:[#allocation2 + $0x50] sm:$0xff] %v937
        %970 = vst [vmem:[#allocation2 + $0x58] sm:$0xff] %v938
        %971 = vst [vmem:[#allocation2 + $0x60] sm:$0xff] %v939
        %972 = vst [vmem:[#allocation2 + $0x68] sm:$0xff] %v940
        %973 = vst [vmem:[#allocation2 + $0x70] sm:$0xff] %v941
        %974 = vst [vmem:[#allocation2 + $0x78] sm:$0xff] %v942
        %975 = vst [vmem:[#allocation2 + $0x80] sm:$0xff] %v943
        %976 = vst [vmem:[#allocation2 + $0x88] sm:$0xff] %v944
        %977 = vst [vmem:[#allocation2 + $0x90] sm:$0xff] %v945
        %978 = vst [vmem:[#allocation2 + $0x98] sm:$0xff] %v946
        %979 = vst [vmem:[#allocation2 + $0xa0] sm:$0xff] %v947
        %980 = vst [vmem:[#allocation2 + $0xa8] sm:$0xff] %v948
        %981 = vst [vmem:[#allocation2 + $0xb0] sm:$0xff] %v949
        %982 = vst [vmem:[#allocation2 + $0xb8] sm:$0xff] %v950
        %983 = vst [vmem:[#allocation2 + $0xc0] sm:$0xff] %v951
        %984 = vst [vmem:[#allocation2 + $0xc8] sm:$0xff] %v952
        %985 = vst [vmem:[#allocation2 + $0xd0] sm:$0xff] %v953
        %986 = vst [vmem:[#allocation2 + $0xd8] sm:$0xff] %v954
        %987 = vst [vmem:[#allocation2 + $0xe0] sm:$0xff] %v955
        %988 = vst [vmem:[#allocation2 + $0xe8] sm:$0xff] %v956
        %989 = vst [vmem:[#allocation2 + $0xf0] sm:$0xff] %v957
        %990 = vst [vmem:[#allocation2 + $0xf8] sm:$0xff] %v958
        %p991 = scmp.eq.s32.totalorder %s39, 1
        // Predicated region
        $region73: #{tpu_custom_call.1} parent=51 // pred_check
          %p992 = pneg %p991
        $region74: #{tpu_custom_call.1} parent=51 // pred_check_branch
          %994 = sbr.rel (%p992) target = $region76
        $region75: #{tpu_custom_call.1} parent=51 // pred_region
          %v995 = vld [vmem:[#allocation2] sm:$0xff]
          %v996 = vld [vmem:[#allocation2 + $0x8] sm:$0xff]
          %v997 = vld [vmem:[#allocation2 + $0x10] sm:$0xff]
          %v998 = vld [vmem:[#allocation2 + $0x18] sm:$0xff]
          %v999 = vld [vmem:[#allocation2 + $0x20] sm:$0xff]
          %v1000 = vld [vmem:[#allocation2 + $0x28] sm:$0xff]
          %v1001 = vld [vmem:[#allocation2 + $0x30] sm:$0xff]
          %v1002 = vld [vmem:[#allocation2 + $0x38] sm:$0xff]
          %v1003 = vld [vmem:[#allocation2 + $0x40] sm:$0xff]
          %v1004 = vld [vmem:[#allocation2 + $0x48] sm:$0xff]
          %v1005 = vld [vmem:[#allocation2 + $0x50] sm:$0xff]
          %v1006 = vld [vmem:[#allocation2 + $0x58] sm:$0xff]
          %v1007 = vld [vmem:[#allocation2 + $0x60] sm:$0xff]
          %v1008 = vld [vmem:[#allocation2 + $0x68] sm:$0xff]
          %v1009 = vld [vmem:[#allocation2 + $0x70] sm:$0xff]
          %v1010 = vld [vmem:[#allocation2 + $0x78] sm:$0xff]
          %v1011 = vld [vmem:[#allocation2 + $0x80] sm:$0xff]
          %v1012 = vld [vmem:[#allocation2 + $0x88] sm:$0xff]
          %v1013 = vld [vmem:[#allocation2 + $0x90] sm:$0xff]
          %v1014 = vld [vmem:[#allocation2 + $0x98] sm:$0xff]
          %v1015 = vld [vmem:[#allocation2 + $0xa0] sm:$0xff]
          %v1016 = vld [vmem:[#allocation2 + $0xa8] sm:$0xff]
          %v1017 = vld [vmem:[#allocation2 + $0xb0] sm:$0xff]
          %v1018 = vld [vmem:[#allocation2 + $0xb8] sm:$0xff]
          %v1019 = vld [vmem:[#allocation2 + $0xc0] sm:$0xff]
          %v1020 = vld [vmem:[#allocation2 + $0xc8] sm:$0xff]
          %v1021 = vld [vmem:[#allocation2 + $0xd0] sm:$0xff]
          %v1022 = vld [vmem:[#allocation2 + $0xd8] sm:$0xff]
          %v1023 = vld [vmem:[#allocation2 + $0xe0] sm:$0xff]
          %v1024 = vld [vmem:[#allocation2 + $0xe8] sm:$0xff]
          %v1025 = vld [vmem:[#allocation2 + $0xf0] sm:$0xff]
          %v1026 = vld [vmem:[#allocation2 + $0xf8] sm:$0xff]
          %v1027 = vld [vmem:[%s501] sm:$0xff]
          %v1028 = vld [vmem:[%s501 + $0x8] sm:$0xff]
          %v1029 = vld [vmem:[%s501 + $0x10] sm:$0xff]
          %v1030 = vld [vmem:[%s501 + $0x18] sm:$0xff]
          %v1031 = vld [vmem:[%s501 + $0x20] sm:$0xff]
          %v1032 = vld [vmem:[%s501 + $0x28] sm:$0xff]
          %v1033 = vld [vmem:[%s501 + $0x30] sm:$0xff]
          %v1034 = vld [vmem:[%s501 + $0x38] sm:$0xff]
          %v1035 = vld [vmem:[%s501 + $0x40] sm:$0xff]
          %v1036 = vld [vmem:[%s501 + $0x48] sm:$0xff]
          %v1037 = vld [vmem:[%s501 + $0x50] sm:$0xff]
          %v1038 = vld [vmem:[%s501 + $0x58] sm:$0xff]
          %v1039 = vld [vmem:[%s501 + $0x60] sm:$0xff]
          %v1040 = vld [vmem:[%s501 + $0x68] sm:$0xff]
          %v1041 = vld [vmem:[%s501 + $0x70] sm:$0xff]
          %v1042 = vld [vmem:[%s501 + $0x78] sm:$0xff]
          %v1043 = vld [vmem:[%s501 + $0x80] sm:$0xff]
          %v1044 = vld [vmem:[%s501 + $0x88] sm:$0xff]
          %v1045 = vld [vmem:[%s501 + $0x90] sm:$0xff]
          %v1046 = vld [vmem:[%s501 + $0x98] sm:$0xff]
          %v1047 = vld [vmem:[%s501 + $0xa0] sm:$0xff]
          %v1048 = vld [vmem:[%s501 + $0xa8] sm:$0xff]
          %v1049 = vld [vmem:[%s501 + $0xb0] sm:$0xff]
          %v1050 = vld [vmem:[%s501 + $0xb8] sm:$0xff]
          %v1051 = vld [vmem:[%s501 + $0xc0] sm:$0xff]
          %v1052 = vld [vmem:[%s501 + $0xc8] sm:$0xff]
          %v1053 = vld [vmem:[%s501 + $0xd0] sm:$0xff]
          %v1054 = vld [vmem:[%s501 + $0xd8] sm:$0xff]
          %v1055 = vld [vmem:[%s501 + $0xe0] sm:$0xff]
          %v1056 = vld [vmem:[%s501 + $0xe8] sm:$0xff]
          %v1057 = vld [vmem:[%s501 + $0xf0] sm:$0xff]
          %v1058 = vld [vmem:[%s501 + $0xf8] sm:$0xff]
          %1060 = vset.pattern.permute.xlu0 0
          %1061 = vperm.xlu0 %1060, %v1027
          %v1062 = vpop.permute.xlu0 %1061
          %1065 = vset.pattern.permute.xlu0 0
          %1066 = vperm.xlu0 %1065, %v1028
          %v1067 = vpop.permute.xlu0 %1066
          %1070 = vset.pattern.permute.xlu0 0
          %1071 = vperm.xlu0 %1070, %v1029
          %v1072 = vpop.permute.xlu0 %1071
          %1075 = vset.pattern.permute.xlu0 0
          %1076 = vperm.xlu0 %1075, %v1030
          %v1077 = vpop.permute.xlu0 %1076
          %1080 = vset.pattern.permute.xlu0 0
          %1081 = vperm.xlu0 %1080, %v1031
          %v1082 = vpop.permute.xlu0 %1081
          %1085 = vset.pattern.permute.xlu0 0
          %1086 = vperm.xlu0 %1085, %v1032
          %v1087 = vpop.permute.xlu0 %1086
          %1090 = vset.pattern.permute.xlu0 0
          %1091 = vperm.xlu0 %1090, %v1033
          %v1092 = vpop.permute.xlu0 %1091
          %1095 = vset.pattern.permute.xlu0 0
          %1096 = vperm.xlu0 %1095, %v1034
          %v1097 = vpop.permute.xlu0 %1096
          %1100 = vset.pattern.permute.xlu0 0
          %1101 = vperm.xlu0 %1100, %v1035
          %v1102 = vpop.permute.xlu0 %1101
          %1105 = vset.pattern.permute.xlu0 0
          %1106 = vperm.xlu0 %1105, %v1036
          %v1107 = vpop.permute.xlu0 %1106
          %1110 = vset.pattern.permute.xlu0 0
          %1111 = vperm.xlu0 %1110, %v1037
          %v1112 = vpop.permute.xlu0 %1111
          %1115 = vset.pattern.permute.xlu0 0
          %1116 = vperm.xlu0 %1115, %v1038
          %v1117 = vpop.permute.xlu0 %1116
          %1120 = vset.pattern.permute.xlu0 0
          %1121 = vperm.xlu0 %1120, %v1039
          %v1122 = vpop.permute.xlu0 %1121
          %1125 = vset.pattern.permute.xlu0 0
          %1126 = vperm.xlu0 %1125, %v1040
          %v1127 = vpop.permute.xlu0 %1126
          %1130 = vset.pattern.permute.xlu0 0
          %1131 = vperm.xlu0 %1130, %v1041
          %v1132 = vpop.permute.xlu0 %1131
          %1135 = vset.pattern.permute.xlu0 0
          %1136 = vperm.xlu0 %1135, %v1042
          %v1137 = vpop.permute.xlu0 %1136
          %1140 = vset.pattern.permute.xlu0 0
          %1141 = vperm.xlu0 %1140, %v1043
          %v1142 = vpop.permute.xlu0 %1141
          %1145 = vset.pattern.permute.xlu0 0
          %1146 = vperm.xlu0 %1145, %v1044
          %v1147 = vpop.permute.xlu0 %1146
          %1150 = vset.pattern.permute.xlu0 0
          %1151 = vperm.xlu0 %1150, %v1045
          %v1152 = vpop.permute.xlu0 %1151
          %1155 = vset.pattern.permute.xlu0 0
          %1156 = vperm.xlu0 %1155, %v1046
          %v1157 = vpop.permute.xlu0 %1156
          %1160 = vset.pattern.permute.xlu0 0
          %1161 = vperm.xlu0 %1160, %v1047
          %v1162 = vpop.permute.xlu0 %1161
          %1165 = vset.pattern.permute.xlu0 0
          %1166 = vperm.xlu0 %1165, %v1048
          %v1167 = vpop.permute.xlu0 %1166
          %1170 = vset.pattern.permute.xlu0 0
          %1171 = vperm.xlu0 %1170, %v1049
          %v1172 = vpop.permute.xlu0 %1171
          %1175 = vset.pattern.permute.xlu0 0
          %1176 = vperm.xlu0 %1175, %v1050
          %v1177 = vpop.permute.xlu0 %1176
          %1180 = vset.pattern.permute.xlu0 0
          %1181 = vperm.xlu0 %1180, %v1051
          %v1182 = vpop.permute.xlu0 %1181
          %1185 = vset.pattern.permute.xlu0 0
          %1186 = vperm.xlu0 %1185, %v1052
          %v1187 = vpop.permute.xlu0 %1186
          %1190 = vset.pattern.permute.xlu0 0
          %1191 = vperm.xlu0 %1190, %v1053
          %v1192 = vpop.permute.xlu0 %1191
          %1195 = vset.pattern.permute.xlu0 0
          %1196 = vperm.xlu0 %1195, %v1054
          %v1197 = vpop.permute.xlu0 %1196
          %1200 = vset.pattern.permute.xlu0 0
          %1201 = vperm.xlu0 %1200, %v1055
          %v1202 = vpop.permute.xlu0 %1201
          %1205 = vset.pattern.permute.xlu0 0
          %1206 = vperm.xlu0 %1205, %v1056
          %v1207 = vpop.permute.xlu0 %1206
          %1210 = vset.pattern.permute.xlu0 0
          %1211 = vperm.xlu0 %1210, %v1057
          %v1212 = vpop.permute.xlu0 %1211
          %1215 = vset.pattern.permute.xlu0 0
          %1216 = vperm.xlu0 %1215, %v1058
          %v1217 = vpop.permute.xlu0 %1216
          %v1219 = vmul.f32 %v995, %v1062
          %v1220 = vmul.f32 %v996, %v1067
          %v1221 = vmul.f32 %v997, %v1072
          %v1222 = vmul.f32 %v998, %v1077
          %v1223 = vmul.f32 %v999, %v1082
          %v1224 = vmul.f32 %v1000, %v1087
          %v1225 = vmul.f32 %v1001, %v1092
          %v1226 = vmul.f32 %v1002, %v1097
          %v1227 = vmul.f32 %v1003, %v1102
          %v1228 = vmul.f32 %v1004, %v1107
          %v1229 = vmul.f32 %v1005, %v1112
          %v1230 = vmul.f32 %v1006, %v1117
          %v1231 = vmul.f32 %v1007, %v1122
          %v1232 = vmul.f32 %v1008, %v1127
          %v1233 = vmul.f32 %v1009, %v1132
          %v1234 = vmul.f32 %v1010, %v1137
          %v1235 = vmul.f32 %v1011, %v1142
          %v1236 = vmul.f32 %v1012, %v1147
          %v1237 = vmul.f32 %v1013, %v1152
          %v1238 = vmul.f32 %v1014, %v1157
          %v1239 = vmul.f32 %v1015, %v1162
          %v1240 = vmul.f32 %v1016, %v1167
          %v1241 = vmul.f32 %v1017, %v1172
          %v1242 = vmul.f32 %v1018, %v1177
          %v1243 = vmul.f32 %v1019, %v1182
          %v1244 = vmul.f32 %v1020, %v1187
          %v1245 = vmul.f32 %v1021, %v1192
          %v1246 = vmul.f32 %v1022, %v1197
          %v1247 = vmul.f32 %v1023, %v1202
          %v1248 = vmul.f32 %v1024, %v1207
          %v1249 = vmul.f32 %v1025, %v1212
          %v1250 = vmul.f32 %v1026, %v1217
          %v1251 = vld [vmem:[%s422] sm:$0xff]
          %v1252 = vld [vmem:[%s422 + $0x8] sm:$0xff]
          %v1253 = vld [vmem:[%s422 + $0x10] sm:$0xff]
          %v1254 = vld [vmem:[%s422 + $0x18] sm:$0xff]
          %v1255 = vld [vmem:[%s422 + $0x20] sm:$0xff]
          %v1256 = vld [vmem:[%s422 + $0x28] sm:$0xff]
          %v1257 = vld [vmem:[%s422 + $0x30] sm:$0xff]
          %v1258 = vld [vmem:[%s422 + $0x38] sm:$0xff]
          %v1259 = vld [vmem:[%s422 + $0x40] sm:$0xff]
          %v1260 = vld [vmem:[%s422 + $0x48] sm:$0xff]
          %v1261 = vld [vmem:[%s422 + $0x50] sm:$0xff]
          %v1262 = vld [vmem:[%s422 + $0x58] sm:$0xff]
          %v1263 = vld [vmem:[%s422 + $0x60] sm:$0xff]
          %v1264 = vld [vmem:[%s422 + $0x68] sm:$0xff]
          %v1265 = vld [vmem:[%s422 + $0x70] sm:$0xff]
          %v1266 = vld [vmem:[%s422 + $0x78] sm:$0xff]
          %v1267 = vld [vmem:[%s422 + $0x80] sm:$0xff]
          %v1268 = vld [vmem:[%s422 + $0x88] sm:$0xff]
          %v1269 = vld [vmem:[%s422 + $0x90] sm:$0xff]
          %v1270 = vld [vmem:[%s422 + $0x98] sm:$0xff]
          %v1271 = vld [vmem:[%s422 + $0xa0] sm:$0xff]
          %v1272 = vld [vmem:[%s422 + $0xa8] sm:$0xff]
          %v1273 = vld [vmem:[%s422 + $0xb0] sm:$0xff]
          %v1274 = vld [vmem:[%s422 + $0xb8] sm:$0xff]
          %v1275 = vld [vmem:[%s422 + $0xc0] sm:$0xff]
          %v1276 = vld [vmem:[%s422 + $0xc8] sm:$0xff]
          %v1277 = vld [vmem:[%s422 + $0xd0] sm:$0xff]
          %v1278 = vld [vmem:[%s422 + $0xd8] sm:$0xff]
          %v1279 = vld [vmem:[%s422 + $0xe0] sm:$0xff]
          %v1280 = vld [vmem:[%s422 + $0xe8] sm:$0xff]
          %v1281 = vld [vmem:[%s422 + $0xf0] sm:$0xff]
          %v1282 = vld [vmem:[%s422 + $0xf8] sm:$0xff]
          %v1283 = vld [vmem:[#allocation8] sm:$0xff]
          %v1284 = vld [vmem:[#allocation8 + $0x8] sm:$0xff]
          %v1285 = vld [vmem:[#allocation8 + $0x10] sm:$0xff]
          %v1286 = vld [vmem:[#allocation8 + $0x18] sm:$0xff]
          %v1287 = vld [vmem:[#allocation8 + $0x20] sm:$0xff]
          %v1288 = vld [vmem:[#allocation8 + $0x28] sm:$0xff]
          %v1289 = vld [vmem:[#allocation8 + $0x30] sm:$0xff]
          %v1290 = vld [vmem:[#allocation8 + $0x38] sm:$0xff]
          %v1291 = vld [vmem:[#allocation8 + $0x40] sm:$0xff]
          %v1292 = vld [vmem:[#allocation8 + $0x48] sm:$0xff]
          %v1293 = vld [vmem:[#allocation8 + $0x50] sm:$0xff]
          %v1294 = vld [vmem:[#allocation8 + $0x58] sm:$0xff]
          %v1295 = vld [vmem:[#allocation8 + $0x60] sm:$0xff]
          %v1296 = vld [vmem:[#allocation8 + $0x68] sm:$0xff]
          %v1297 = vld [vmem:[#allocation8 + $0x70] sm:$0xff]
          %v1298 = vld [vmem:[#allocation8 + $0x78] sm:$0xff]
          %v1299 = vld [vmem:[#allocation8 + $0x80] sm:$0xff]
          %v1300 = vld [vmem:[#allocation8 + $0x88] sm:$0xff]
          %v1301 = vld [vmem:[#allocation8 + $0x90] sm:$0xff]
          %v1302 = vld [vmem:[#allocation8 + $0x98] sm:$0xff]
          %v1303 = vld [vmem:[#allocation8 + $0xa0] sm:$0xff]
          %v1304 = vld [vmem:[#allocation8 + $0xa8] sm:$0xff]
          %v1305 = vld [vmem:[#allocation8 + $0xb0] sm:$0xff]
          %v1306 = vld [vmem:[#allocation8 + $0xb8] sm:$0xff]
          %v1307 = vld [vmem:[#allocation8 + $0xc0] sm:$0xff]
          %v1308 = vld [vmem:[#allocation8 + $0xc8] sm:$0xff]
          %v1309 = vld [vmem:[#allocation8 + $0xd0] sm:$0xff]
          %v1310 = vld [vmem:[#allocation8 + $0xd8] sm:$0xff]
          %v1311 = vld [vmem:[#allocation8 + $0xe0] sm:$0xff]
          %v1312 = vld [vmem:[#allocation8 + $0xe8] sm:$0xff]
          %v1313 = vld [vmem:[#allocation8 + $0xf0] sm:$0xff]
          %v1314 = vld [vmem:[#allocation8 + $0xf8] sm:$0xff]
          %v1315 = vld [vmem:[%s5] sm:$0x1]
          %v1317 = vperm.slane %v1315, 0
          %1319 = vmatpush.msra.mxu0 %v1298
          %1320 = vmatpush.msra.mxu0 %v1297
          %1321 = vmatpush.msra.mxu0 %v1296
          %1322 = vmatpush.msra.mxu0 %v1295
          %1323 = vmatpush.msra.mxu0 %v1294
          %1324 = vmatpush.msra.mxu0 %v1293
          %1325 = vmatpush.msra.mxu0 %v1292
          %1326 = vmatpush.msra.mxu0 %v1291
          %1327 = vmatpush.msra.mxu0 %v1290
          %1328 = vmatpush.msra.mxu0 %v1289
          %1329 = vmatpush.msra.mxu0 %v1288
          %1330 = vmatpush.msra.mxu0 %v1287
          %1331 = vmatpush.msra.mxu0 %v1286
          %1332 = vmatpush.msra.mxu0 %v1285
          %1333 = vmatpush.msra.mxu0 %v1284
          %1334 = vmatpush.msra.mxu0 %v1283
          %1335 = vmatmul.f32.gmra.mxu0 %v1251
          %v1336 = vpop.f32.mrf.mxu0
          %v1337 = vadd.f32 %v1317, %v1336
          %1338 = vmatmul.f32.gmra.mxu0 %v1252
          %v1339 = vpop.f32.mrf.mxu0
          %v1340 = vadd.f32 %v1317, %v1339
          %1341 = vmatmul.f32.gmra.mxu0 %v1253
          %v1342 = vpop.f32.mrf.mxu0
          %v1343 = vadd.f32 %v1317, %v1342
          %1344 = vmatmul.f32.gmra.mxu0 %v1254
          %v1345 = vpop.f32.mrf.mxu0
          %v1346 = vadd.f32 %v1317, %v1345
          %1347 = vmatmul.f32.gmra.mxu0 %v1255
          %v1348 = vpop.f32.mrf.mxu0
          %v1349 = vadd.f32 %v1317, %v1348
          %1350 = vmatmul.f32.gmra.mxu0 %v1256
          %v1351 = vpop.f32.mrf.mxu0
          %v1352 = vadd.f32 %v1317, %v1351
          %1353 = vmatmul.f32.gmra.mxu0 %v1257
          %v1354 = vpop.f32.mrf.mxu0
          %v1355 = vadd.f32 %v1317, %v1354
          %1356 = vmatmul.f32.gmra.mxu0 %v1258
          %v1357 = vpop.f32.mrf.mxu0
          %v1358 = vadd.f32 %v1317, %v1357
          %1359 = vmatmul.f32.gmra.mxu0 %v1259
          %v1360 = vpop.f32.mrf.mxu0
          %v1361 = vadd.f32 %v1317, %v1360
          %1362 = vmatmul.f32.gmra.mxu0 %v1260
          %v1363 = vpop.f32.mrf.mxu0
          %v1364 = vadd.f32 %v1317, %v1363
          %1365 = vmatmul.f32.gmra.mxu0 %v1261
          %v1366 = vpop.f32.mrf.mxu0
          %v1367 = vadd.f32 %v1317, %v1366
          %1368 = vmatmul.f32.gmra.mxu0 %v1262
          %v1369 = vpop.f32.mrf.mxu0
          %v1370 = vadd.f32 %v1317, %v1369
          %1371 = vmatmul.f32.gmra.mxu0 %v1263
          %v1372 = vpop.f32.mrf.mxu0
          %v1373 = vadd.f32 %v1317, %v1372
          %1374 = vmatmul.f32.gmra.mxu0 %v1264
          %v1375 = vpop.f32.mrf.mxu0
          %v1376 = vadd.f32 %v1317, %v1375
          %1377 = vmatmul.f32.gmra.mxu0 %v1265
          %v1378 = vpop.f32.mrf.mxu0
          %v1379 = vadd.f32 %v1317, %v1378
          %1380 = vmatmul.f32.gmra.mxu0 %v1266
          %v1381 = vpop.f32.mrf.mxu0
          %v1382 = vadd.f32 %v1317, %v1381
          %1383 = vmatmul.f32.gmra.mxu0 %v1267
          %v1384 = vpop.f32.mrf.mxu0
          %v1385 = vadd.f32 %v1317, %v1384
          %1386 = vmatmul.f32.gmra.mxu0 %v1268
          %v1387 = vpop.f32.mrf.mxu0
          %v1388 = vadd.f32 %v1317, %v1387
          %1389 = vmatmul.f32.gmra.mxu0 %v1269
          %v1390 = vpop.f32.mrf.mxu0
          %v1391 = vadd.f32 %v1317, %v1390
          %1392 = vmatmul.f32.gmra.mxu0 %v1270
          %v1393 = vpop.f32.mrf.mxu0
          %v1394 = vadd.f32 %v1317, %v1393
          %1395 = vmatmul.f32.gmra.mxu0 %v1271
          %v1396 = vpop.f32.mrf.mxu0
          %v1397 = vadd.f32 %v1317, %v1396
          %1398 = vmatmul.f32.gmra.mxu0 %v1272
          %v1399 = vpop.f32.mrf.mxu0
          %v1400 = vadd.f32 %v1317, %v1399
          %1401 = vmatmul.f32.gmra.mxu0 %v1273
          %v1402 = vpop.f32.mrf.mxu0
          %v1403 = vadd.f32 %v1317, %v1402
          %1404 = vmatmul.f32.gmra.mxu0 %v1274
          %v1405 = vpop.f32.mrf.mxu0
          %v1406 = vadd.f32 %v1317, %v1405
          %1407 = vmatmul.f32.gmra.mxu0 %v1275
          %v1408 = vpop.f32.mrf.mxu0
          %v1409 = vadd.f32 %v1317, %v1408
          %1410 = vmatmul.f32.gmra.mxu0 %v1276
          %v1411 = vpop.f32.mrf.mxu0
          %v1412 = vadd.f32 %v1317, %v1411
          %1413 = vmatmul.f32.gmra.mxu0 %v1277
          %v1414 = vpop.f32.mrf.mxu0
          %v1415 = vadd.f32 %v1317, %v1414
          %1416 = vmatmul.f32.gmra.mxu0 %v1278
          %v1417 = vpop.f32.mrf.mxu0
          %v1418 = vadd.f32 %v1317, %v1417
          %1419 = vmatmul.f32.gmra.mxu0 %v1279
          %v1420 = vpop.f32.mrf.mxu0
          %v1421 = vadd.f32 %v1317, %v1420
          %1422 = vmatmul.f32.gmra.mxu0 %v1280
          %v1423 = vpop.f32.mrf.mxu0
          %v1424 = vadd.f32 %v1317, %v1423
          %1425 = vmatmul.f32.gmra.mxu0 %v1281
          %v1426 = vpop.f32.mrf.mxu0
          %v1427 = vadd.f32 %v1317, %v1426
          %1428 = vmatmul.f32.gmra.mxu0 %v1282
          %v1429 = vpop.f32.mrf.mxu0
          %v1430 = vadd.f32 %v1317, %v1429
          %1431 = vdwg.mxu0
          %1432 = vmatpush.msra.mxu0 %v1314
          %1433 = vmatpush.msra.mxu0 %v1313
          %1434 = vmatpush.msra.mxu0 %v1312
          %1435 = vmatpush.msra.mxu0 %v1311
          %1436 = vmatpush.msra.mxu0 %v1310
          %1437 = vmatpush.msra.mxu0 %v1309
          %1438 = vmatpush.msra.mxu0 %v1308
          %1439 = vmatpush.msra.mxu0 %v1307
          %1440 = vmatpush.msra.mxu0 %v1306
          %1441 = vmatpush.msra.mxu0 %v1305
          %1442 = vmatpush.msra.mxu0 %v1304
          %1443 = vmatpush.msra.mxu0 %v1303
          %1444 = vmatpush.msra.mxu0 %v1302
          %1445 = vmatpush.msra.mxu0 %v1301
          %1446 = vmatpush.msra.mxu0 %v1300
          %1447 = vmatpush.msra.mxu0 %v1299
          %1448 = vmatmul.f32.gmra.mxu0 %v1219
          %v1449 = vpop.f32.mrf.mxu0
          %v1450 = vadd.f32 %v1337, %v1449
          %1451 = vmatmul.f32.gmra.mxu0 %v1220
          %v1452 = vpop.f32.mrf.mxu0
          %v1453 = vadd.f32 %v1340, %v1452
          %1454 = vmatmul.f32.gmra.mxu0 %v1221
          %v1455 = vpop.f32.mrf.mxu0
          %v1456 = vadd.f32 %v1343, %v1455
          %1457 = vmatmul.f32.gmra.mxu0 %v1222
          %v1458 = vpop.f32.mrf.mxu0
          %v1459 = vadd.f32 %v1346, %v1458
          %1460 = vmatmul.f32.gmra.mxu0 %v1223
          %v1461 = vpop.f32.mrf.mxu0
          %v1462 = vadd.f32 %v1349, %v1461
          %1463 = vmatmul.f32.gmra.mxu0 %v1224
          %v1464 = vpop.f32.mrf.mxu0
          %v1465 = vadd.f32 %v1352, %v1464
          %1466 = vmatmul.f32.gmra.mxu0 %v1225
          %v1467 = vpop.f32.mrf.mxu0
          %v1468 = vadd.f32 %v1355, %v1467
          %1469 = vmatmul.f32.gmra.mxu0 %v1226
          %v1470 = vpop.f32.mrf.mxu0
          %v1471 = vadd.f32 %v1358, %v1470
          %1472 = vmatmul.f32.gmra.mxu0 %v1227
          %v1473 = vpop.f32.mrf.mxu0
          %v1474 = vadd.f32 %v1361, %v1473
          %1475 = vmatmul.f32.gmra.mxu0 %v1228
          %v1476 = vpop.f32.mrf.mxu0
          %v1477 = vadd.f32 %v1364, %v1476
          %1478 = vmatmul.f32.gmra.mxu0 %v1229
          %v1479 = vpop.f32.mrf.mxu0
          %v1480 = vadd.f32 %v1367, %v1479
          %1481 = vmatmul.f32.gmra.mxu0 %v1230
          %v1482 = vpop.f32.mrf.mxu0
          %v1483 = vadd.f32 %v1370, %v1482
          %1484 = vmatmul.f32.gmra.mxu0 %v1231
          %v1485 = vpop.f32.mrf.mxu0
          %v1486 = vadd.f32 %v1373, %v1485
          %1487 = vmatmul.f32.gmra.mxu0 %v1232
          %v1488 = vpop.f32.mrf.mxu0
          %v1489 = vadd.f32 %v1376, %v1488
          %1490 = vmatmul.f32.gmra.mxu0 %v1233
          %v1491 = vpop.f32.mrf.mxu0
          %v1492 = vadd.f32 %v1379, %v1491
          %1493 = vmatmul.f32.gmra.mxu0 %v1234
          %v1494 = vpop.f32.mrf.mxu0
          %v1495 = vadd.f32 %v1382, %v1494
          %1496 = vmatmul.f32.gmra.mxu0 %v1235
          %v1497 = vpop.f32.mrf.mxu0
          %v1498 = vadd.f32 %v1385, %v1497
          %1499 = vmatmul.f32.gmra.mxu0 %v1236
          %v1500 = vpop.f32.mrf.mxu0
          %v1501 = vadd.f32 %v1388, %v1500
          %1502 = vmatmul.f32.gmra.mxu0 %v1237
          %v1503 = vpop.f32.mrf.mxu0
          %v1504 = vadd.f32 %v1391, %v1503
          %1505 = vmatmul.f32.gmra.mxu0 %v1238
          %v1506 = vpop.f32.mrf.mxu0
          %v1507 = vadd.f32 %v1394, %v1506
          %1508 = vmatmul.f32.gmra.mxu0 %v1239
          %v1509 = vpop.f32.mrf.mxu0
          %v1510 = vadd.f32 %v1397, %v1509
          %1511 = vmatmul.f32.gmra.mxu0 %v1240
          %v1512 = vpop.f32.mrf.mxu0
          %v1513 = vadd.f32 %v1400, %v1512
          %1514 = vmatmul.f32.gmra.mxu0 %v1241
          %v1515 = vpop.f32.mrf.mxu0
          %v1516 = vadd.f32 %v1403, %v1515
          %1517 = vmatmul.f32.gmra.mxu0 %v1242
          %v1518 = vpop.f32.mrf.mxu0
          %v1519 = vadd.f32 %v1406, %v1518
          %1520 = vmatmul.f32.gmra.mxu0 %v1243
          %v1521 = vpop.f32.mrf.mxu0
          %v1522 = vadd.f32 %v1409, %v1521
          %1523 = vmatmul.f32.gmra.mxu0 %v1244
          %v1524 = vpop.f32.mrf.mxu0
          %v1525 = vadd.f32 %v1412, %v1524
          %1526 = vmatmul.f32.gmra.mxu0 %v1245
          %v1527 = vpop.f32.mrf.mxu0
          %v1528 = vadd.f32 %v1415, %v1527
          %1529 = vmatmul.f32.gmra.mxu0 %v1246
          %v1530 = vpop.f32.mrf.mxu0
          %v1531 = vadd.f32 %v1418, %v1530
          %1532 = vmatmul.f32.gmra.mxu0 %v1247
          %v1533 = vpop.f32.mrf.mxu0
          %v1534 = vadd.f32 %v1421, %v1533
          %1535 = vmatmul.f32.gmra.mxu0 %v1248
          %v1536 = vpop.f32.mrf.mxu0
          %v1537 = vadd.f32 %v1424, %v1536
          %1538 = vmatmul.f32.gmra.mxu0 %v1249
          %v1539 = vpop.f32.mrf.mxu0
          %v1540 = vadd.f32 %v1427, %v1539
          %1541 = vmatmul.f32.gmra.mxu0 %v1250
          %v1542 = vpop.f32.mrf.mxu0
          %v1543 = vadd.f32 %v1430, %v1542
          %1544 = vdwg.mxu0
          %v1545 = vmax.f32 %v1450, 0.0
          %v1546 = vmax.f32 %v1453, 0.0
          %v1547 = vmax.f32 %v1456, 0.0
          %v1548 = vmax.f32 %v1459, 0.0
          %v1549 = vmax.f32 %v1462, 0.0
          %v1550 = vmax.f32 %v1465, 0.0
          %v1551 = vmax.f32 %v1468, 0.0
          %v1552 = vmax.f32 %v1471, 0.0
          %v1553 = vmax.f32 %v1474, 0.0
          %v1554 = vmax.f32 %v1477, 0.0
          %v1555 = vmax.f32 %v1480, 0.0
          %v1556 = vmax.f32 %v1483, 0.0
          %v1557 = vmax.f32 %v1486, 0.0
          %v1558 = vmax.f32 %v1489, 0.0
          %v1559 = vmax.f32 %v1492, 0.0
          %v1560 = vmax.f32 %v1495, 0.0
          %v1561 = vmax.f32 %v1498, 0.0
          %v1562 = vmax.f32 %v1501, 0.0
          %v1563 = vmax.f32 %v1504, 0.0
          %v1564 = vmax.f32 %v1507, 0.0
          %v1565 = vmax.f32 %v1510, 0.0
          %v1566 = vmax.f32 %v1513, 0.0
          %v1567 = vmax.f32 %v1516, 0.0
          %v1568 = vmax.f32 %v1519, 0.0
          %v1569 = vmax.f32 %v1522, 0.0
          %v1570 = vmax.f32 %v1525, 0.0
          %v1571 = vmax.f32 %v1528, 0.0
          %v1572 = vmax.f32 %v1531, 0.0
          %v1573 = vmax.f32 %v1534, 0.0
          %v1574 = vmax.f32 %v1537, 0.0
          %v1575 = vmax.f32 %v1540, 0.0
          %v1576 = vmax.f32 %v1543, 0.0
          %1577 = vst [vmem:[%s480] sm:$0xff] %v1545
          %1578 = vst [vmem:[%s480 + $0x8] sm:$0xff] %v1546
          %1579 = vst [vmem:[%s480 + $0x10] sm:$0xff] %v1547
          %1580 = vst [vmem:[%s480 + $0x18] sm:$0xff] %v1548
          %1581 = vst [vmem:[%s480 + $0x20] sm:$0xff] %v1549
          %1582 = vst [vmem:[%s480 + $0x28] sm:$0xff] %v1550
          %1583 = vst [vmem:[%s480 + $0x30] sm:$0xff] %v1551
          %1584 = vst [vmem:[%s480 + $0x38] sm:$0xff] %v1552
          %1585 = vst [vmem:[%s480 + $0x40] sm:$0xff] %v1553
          %1586 = vst [vmem:[%s480 + $0x48] sm:$0xff] %v1554
          %1587 = vst [vmem:[%s480 + $0x50] sm:$0xff] %v1555
          %1588 = vst [vmem:[%s480 + $0x58] sm:$0xff] %v1556
          %1589 = vst [vmem:[%s480 + $0x60] sm:$0xff] %v1557
          %1590 = vst [vmem:[%s480 + $0x68] sm:$0xff] %v1558
          %1591 = vst [vmem:[%s480 + $0x70] sm:$0xff] %v1559
          %1592 = vst [vmem:[%s480 + $0x78] sm:$0xff] %v1560
          %1593 = vst [vmem:[%s480 + $0x80] sm:$0xff] %v1561
          %1594 = vst [vmem:[%s480 + $0x88] sm:$0xff] %v1562
          %1595 = vst [vmem:[%s480 + $0x90] sm:$0xff] %v1563
          %1596 = vst [vmem:[%s480 + $0x98] sm:$0xff] %v1564
          %1597 = vst [vmem:[%s480 + $0xa0] sm:$0xff] %v1565
          %1598 = vst [vmem:[%s480 + $0xa8] sm:$0xff] %v1566
          %1599 = vst [vmem:[%s480 + $0xb0] sm:$0xff] %v1567
          %1600 = vst [vmem:[%s480 + $0xb8] sm:$0xff] %v1568
          %1601 = vst [vmem:[%s480 + $0xc0] sm:$0xff] %v1569
          %1602 = vst [vmem:[%s480 + $0xc8] sm:$0xff] %v1570
          %1603 = vst [vmem:[%s480 + $0xd0] sm:$0xff] %v1571
          %1604 = vst [vmem:[%s480 + $0xd8] sm:$0xff] %v1572
          %1605 = vst [vmem:[%s480 + $0xe0] sm:$0xff] %v1573
          %1606 = vst [vmem:[%s480 + $0xe8] sm:$0xff] %v1574
          %1607 = vst [vmem:[%s480 + $0xf0] sm:$0xff] %v1575
          %1608 = vst [vmem:[%s480 + $0xf8] sm:$0xff] %v1576
          %v1609 = vld [vmem:[#allocation9] sm:$0xff]
          %v1610 = vld [vmem:[#allocation9 + $0x8] sm:$0xff]
          %v1611 = vld [vmem:[#allocation9 + $0x10] sm:$0xff]
          %v1612 = vld [vmem:[#allocation9 + $0x18] sm:$0xff]
          %v1613 = vld [vmem:[#allocation9 + $0x20] sm:$0xff]
          %v1614 = vld [vmem:[#allocation9 + $0x28] sm:$0xff]
          %v1615 = vld [vmem:[#allocation9 + $0x30] sm:$0xff]
          %v1616 = vld [vmem:[#allocation9 + $0x38] sm:$0xff]
          %v1617 = vld [vmem:[#allocation9 + $0x40] sm:$0xff]
          %v1618 = vld [vmem:[#allocation9 + $0x48] sm:$0xff]
          %v1619 = vld [vmem:[#allocation9 + $0x50] sm:$0xff]
          %v1620 = vld [vmem:[#allocation9 + $0x58] sm:$0xff]
          %v1621 = vld [vmem:[#allocation9 + $0x60] sm:$0xff]
          %v1622 = vld [vmem:[#allocation9 + $0x68] sm:$0xff]
          %v1623 = vld [vmem:[#allocation9 + $0x70] sm:$0xff]
          %v1624 = vld [vmem:[#allocation9 + $0x78] sm:$0xff]
          %v1625 = vld [vmem:[%s7] sm:$0x1]
          %v1627 = vperm.slane %v1625, 0
          %1629 = vmatpush.msra.mxu0 %v1624
          %1630 = vmatpush.msra.mxu0 %v1623
          %1631 = vmatpush.msra.mxu0 %v1622
          %1632 = vmatpush.msra.mxu0 %v1621
          %1633 = vmatpush.msra.mxu0 %v1620
          %1634 = vmatpush.msra.mxu0 %v1619
          %1635 = vmatpush.msra.mxu0 %v1618
          %1636 = vmatpush.msra.mxu0 %v1617
          %1637 = vmatpush.msra.mxu0 %v1616
          %1638 = vmatpush.msra.mxu0 %v1615
          %1639 = vmatpush.msra.mxu0 %v1614
          %1640 = vmatpush.msra.mxu0 %v1613
          %1641 = vmatpush.msra.mxu0 %v1612
          %1642 = vmatpush.msra.mxu0 %v1611
          %1643 = vmatpush.msra.mxu0 %v1610
          %1644 = vmatpush.msra.mxu0 %v1609
          %1645 = vmatmul.f32.gmra.mxu0 %v1545
          %v1646 = vpop.f32.mrf.mxu0
          %v1647 = vadd.f32 %v1627, %v1646
          %1648 = vmatmul.f32.gmra.mxu0 %v1546
          %v1649 = vpop.f32.mrf.mxu0
          %v1650 = vadd.f32 %v1627, %v1649
          %1651 = vmatmul.f32.gmra.mxu0 %v1547
          %v1652 = vpop.f32.mrf.mxu0
          %v1653 = vadd.f32 %v1627, %v1652
          %1654 = vmatmul.f32.gmra.mxu0 %v1548
          %v1655 = vpop.f32.mrf.mxu0
          %v1656 = vadd.f32 %v1627, %v1655
          %1657 = vmatmul.f32.gmra.mxu0 %v1549
          %v1658 = vpop.f32.mrf.mxu0
          %v1659 = vadd.f32 %v1627, %v1658
          %1660 = vmatmul.f32.gmra.mxu0 %v1550
          %v1661 = vpop.f32.mrf.mxu0
          %v1662 = vadd.f32 %v1627, %v1661
          %1663 = vmatmul.f32.gmra.mxu0 %v1551
          %v1664 = vpop.f32.mrf.mxu0
          %v1665 = vadd.f32 %v1627, %v1664
          %1666 = vmatmul.f32.gmra.mxu0 %v1552
          %v1667 = vpop.f32.mrf.mxu0
          %v1668 = vadd.f32 %v1627, %v1667
          %1669 = vmatmul.f32.gmra.mxu0 %v1553
          %v1670 = vpop.f32.mrf.mxu0
          %v1671 = vadd.f32 %v1627, %v1670
          %1672 = vmatmul.f32.gmra.mxu0 %v1554
          %v1673 = vpop.f32.mrf.mxu0
          %v1674 = vadd.f32 %v1627, %v1673
          %1675 = vmatmul.f32.gmra.mxu0 %v1555
          %v1676 = vpop.f32.mrf.mxu0
          %v1677 = vadd.f32 %v1627, %v1676
          %1678 = vmatmul.f32.gmra.mxu0 %v1556
          %v1679 = vpop.f32.mrf.mxu0
          %v1680 = vadd.f32 %v1627, %v1679
          %1681 = vmatmul.f32.gmra.mxu0 %v1557
          %v1682 = vpop.f32.mrf.mxu0
          %v1683 = vadd.f32 %v1627, %v1682
          %1684 = vmatmul.f32.gmra.mxu0 %v1558
          %v1685 = vpop.f32.mrf.mxu0
          %v1686 = vadd.f32 %v1627, %v1685
          %1687 = vmatmul.f32.gmra.mxu0 %v1559
          %v1688 = vpop.f32.mrf.mxu0
          %v1689 = vadd.f32 %v1627, %v1688
          %1690 = vmatmul.f32.gmra.mxu0 %v1560
          %v1691 = vpop.f32.mrf.mxu0
          %v1692 = vadd.f32 %v1627, %v1691
          %1693 = vmatmul.f32.gmra.mxu0 %v1561
          %v1694 = vpop.f32.mrf.mxu0
          %v1695 = vadd.f32 %v1627, %v1694
          %1696 = vmatmul.f32.gmra.mxu0 %v1562
          %v1697 = vpop.f32.mrf.mxu0
          %v1698 = vadd.f32 %v1627, %v1697
          %1699 = vmatmul.f32.gmra.mxu0 %v1563
          %v1700 = vpop.f32.mrf.mxu0
          %v1701 = vadd.f32 %v1627, %v1700
          %1702 = vmatmul.f32.gmra.mxu0 %v1564
          %v1703 = vpop.f32.mrf.mxu0
          %v1704 = vadd.f32 %v1627, %v1703
          %1705 = vmatmul.f32.gmra.mxu0 %v1565
          %v1706 = vpop.f32.mrf.mxu0
          %v1707 = vadd.f32 %v1627, %v1706
          %1708 = vmatmul.f32.gmra.mxu0 %v1566
          %v1709 = vpop.f32.mrf.mxu0
          %v1710 = vadd.f32 %v1627, %v1709
          %1711 = vmatmul.f32.gmra.mxu0 %v1567
          %v1712 = vpop.f32.mrf.mxu0
          %v1713 = vadd.f32 %v1627, %v1712
          %1714 = vmatmul.f32.gmra.mxu0 %v1568
          %v1715 = vpop.f32.mrf.mxu0
          %v1716 = vadd.f32 %v1627, %v1715
          %1717 = vmatmul.f32.gmra.mxu0 %v1569
          %v1718 = vpop.f32.mrf.mxu0
          %v1719 = vadd.f32 %v1627, %v1718
          %1720 = vmatmul.f32.gmra.mxu0 %v1570
          %v1721 = vpop.f32.mrf.mxu0
          %v1722 = vadd.f32 %v1627, %v1721
          %1723 = vmatmul.f32.gmra.mxu0 %v1571
          %v1724 = vpop.f32.mrf.mxu0
          %v1725 = vadd.f32 %v1627, %v1724
          %1726 = vmatmul.f32.gmra.mxu0 %v1572
          %v1727 = vpop.f32.mrf.mxu0
          %v1728 = vadd.f32 %v1627, %v1727
          %1729 = vmatmul.f32.gmra.mxu0 %v1573
          %v1730 = vpop.f32.mrf.mxu0
          %v1731 = vadd.f32 %v1627, %v1730
          %1732 = vmatmul.f32.gmra.mxu0 %v1574
          %v1733 = vpop.f32.mrf.mxu0
          %v1734 = vadd.f32 %v1627, %v1733
          %1735 = vmatmul.f32.gmra.mxu0 %v1575
          %v1736 = vpop.f32.mrf.mxu0
          %v1737 = vadd.f32 %v1627, %v1736
          %1738 = vmatmul.f32.gmra.mxu0 %v1576
          %v1739 = vpop.f32.mrf.mxu0
          %v1740 = vadd.f32 %v1627, %v1739
          %1741 = vdwg.mxu0
          %1742 = vst [vmem:[%s487] sm:$0xff] %v1647
          %1743 = vst [vmem:[%s487 + $0x8] sm:$0xff] %v1650
          %1744 = vst [vmem:[%s487 + $0x10] sm:$0xff] %v1653
          %1745 = vst [vmem:[%s487 + $0x18] sm:$0xff] %v1656
          %1746 = vst [vmem:[%s487 + $0x20] sm:$0xff] %v1659
          %1747 = vst [vmem:[%s487 + $0x28] sm:$0xff] %v1662
          %1748 = vst [vmem:[%s487 + $0x30] sm:$0xff] %v1665
          %1749 = vst [vmem:[%s487 + $0x38] sm:$0xff] %v1668
          %1750 = vst [vmem:[%s487 + $0x40] sm:$0xff] %v1671
          %1751 = vst [vmem:[%s487 + $0x48] sm:$0xff] %v1674
          %1752 = vst [vmem:[%s487 + $0x50] sm:$0xff] %v1677
          %1753 = vst [vmem:[%s487 + $0x58] sm:$0xff] %v1680
          %1754 = vst [vmem:[%s487 + $0x60] sm:$0xff] %v1683
          %1755 = vst [vmem:[%s487 + $0x68] sm:$0xff] %v1686
          %1756 = vst [vmem:[%s487 + $0x70] sm:$0xff] %v1689
          %1757 = vst [vmem:[%s487 + $0x78] sm:$0xff] %v1692
          %1758 = vst [vmem:[%s487 + $0x80] sm:$0xff] %v1695
          %1759 = vst [vmem:[%s487 + $0x88] sm:$0xff] %v1698
          %1760 = vst [vmem:[%s487 + $0x90] sm:$0xff] %v1701
          %1761 = vst [vmem:[%s487 + $0x98] sm:$0xff] %v1704
          %1762 = vst [vmem:[%s487 + $0xa0] sm:$0xff] %v1707
          %1763 = vst [vmem:[%s487 + $0xa8] sm:$0xff] %v1710
          %1764 = vst [vmem:[%s487 + $0xb0] sm:$0xff] %v1713
          %1765 = vst [vmem:[%s487 + $0xb8] sm:$0xff] %v1716
          %1766 = vst [vmem:[%s487 + $0xc0] sm:$0xff] %v1719
          %1767 = vst [vmem:[%s487 + $0xc8] sm:$0xff] %v1722
          %1768 = vst [vmem:[%s487 + $0xd0] sm:$0xff] %v1725
          %1769 = vst [vmem:[%s487 + $0xd8] sm:$0xff] %v1728
          %1770 = vst [vmem:[%s487 + $0xe0] sm:$0xff] %v1731
          %1771 = vst [vmem:[%s487 + $0xe8] sm:$0xff] %v1734
          %1772 = vst [vmem:[%s487 + $0xf0] sm:$0xff] %v1737
          %1773 = vst [vmem:[%s487 + $0xf8] sm:$0xff] %v1740
        $region76: #{tpu_custom_call.1} parent=51 // pred_fallthru
          _
        %s1774 = sand.u32 %s244, 1
        %s1775 = scalar_lea.sflag [#allocation5], %s1774
        %s1776 = sand.u32 %s244, 1
        %s1777 = smul.addr %s1776, 256
        %s1778 = scalar_lea.vmem [#allocation11], %s1777
        %s1779 = sand.u32 %s270, 1
        %s1780 = scalar_lea.sflag [#allocation13], %s1779
        %s1781 = sand.u32 %s270, 1
        %s1782 = smul.addr %s1781, 256
        %s1783 = scalar_lea.vmem [#allocation12], %s1782
        // Predicated region
        $region77: #{tpu_custom_call.1} parent=51 // pred_check
          %p1784 = pneg %p254
        $region78: #{tpu_custom_call.1} parent=51 // pred_check_branch
          %1786 = sbr.rel (%p1784) target = $region80
        $region79: #{tpu_custom_call.1} parent=51 // pred_region
          %s1787 = smul.u32 32, %s38
          %1789 = vsyncadd %s1775, 0
          %s1790 = smul.addr %s1787, 8
          %s1791 = scalar_lea.hbm %s8, %s1790
          %s1792 = sshll.u32 %s1778, 4
          %s1793 = int_to_ptr.vmem [resolvable:$true] %s1792
          %s1794 = sshll.u32 %s1791, 4
          %s1795 = int_to_ptr.hbm [resolvable:$true] %s1794
          %1800 = dma.vmem_to_hbm [thread:$0]  %s1793, 4096, %s1795, %s1775, 128, 128, 8
        $region80: #{tpu_custom_call.1} parent=51 // pred_fallthru
          _
        // Predicated region
        $region81: #{tpu_custom_call.1} parent=51 // pred_check
          %p1801 = pneg %p280
        $region82: #{tpu_custom_call.1} parent=51 // pred_check_branch
          %1803 = sbr.rel (%p1801) target = $region84
        $region83: #{tpu_custom_call.1} parent=51 // pred_region
          %s1804 = smul.u32 32, %s38
          %1806 = vsyncadd %s1780, 0
          %s1807 = smul.addr %s1804, 8
          %s1808 = scalar_lea.hbm %s9, %s1807
          %s1809 = sshll.u32 %s1783, 4
          %s1810 = int_to_ptr.vmem [resolvable:$true] %s1809
          %s1811 = sshll.u32 %s1808, 4
          %s1812 = int_to_ptr.hbm [resolvable:$true] %s1811
          %1817 = dma.vmem_to_hbm [thread:$0]  %s1810, 4096, %s1812, %s1780, 128, 128, 8
        $region84: #{tpu_custom_call.1} parent=51 // pred_fallthru
          _
      $region52: #{tpu_custom_call.1} parent=5 // pred_fallthru
        _
      %p1818 = scmp.le.s32.totalorder 2, %s29
      // Predicated region
      $region85: #{tpu_custom_call.1} parent=5 // pred_check
        %p1819 = pneg %p1818
      $region86: #{tpu_custom_call.1} parent=5 // pred_check_branch
        %1821 = sbr.rel (%p1819) target = $region88
      $region87: #{tpu_custom_call.1} parent=5 // pred_region
        %s1822 = ssub.s32 %s29, 2
        // Predicated region
        $region89: #{tpu_custom_call.1} parent=87 // pred_check
          %p1823 = pneg %p260
        $region90: #{tpu_custom_call.1} parent=87 // pred_check_branch
          %1825 = sbr.rel (%p1823) target = $region92
        $region91: #{tpu_custom_call.1} parent=87 // pred_region
          %s1826 = sand.u32 %s245, 1
          %s1827 = scalar_lea.sflag [#allocation5], %s1826
          %s1828 = sand.u32 %s245, 1
          %s1829 = smul.addr %s1828, 256
          %s1830 = scalar_lea.vmem [#allocation11], %s1829
          %1832 = dma.done %s1827, 4096
        $region92: #{tpu_custom_call.1} parent=87 // pred_fallthru
          _
        // Predicated region
        $region93: #{tpu_custom_call.1} parent=87 // pred_check
          %p1833 = pneg %p286
        $region94: #{tpu_custom_call.1} parent=87 // pred_check_branch
          %1835 = sbr.rel (%p1833) target = $region96
        $region95: #{tpu_custom_call.1} parent=87 // pred_region
          %s1836 = sand.u32 %s271, 1
          %s1837 = scalar_lea.sflag [#allocation13], %s1836
          %s1838 = sand.u32 %s271, 1
          %s1839 = smul.addr %s1838, 256
          %s1840 = scalar_lea.vmem [#allocation12], %s1839
          %1842 = dma.done %s1837, 4096
        $region96: #{tpu_custom_call.1} parent=87 // pred_fallthru
          _
      $region88: #{tpu_custom_call.1} parent=5 // pred_fallthru
        _
    $region6: #{tpu_custom_call.1} parent=1 // loop_footer
      %s33 = sadd.s32 1, %s29
    $region7: #{tpu_custom_call.1} parent=1 // loop_footer_branch
      %28 = sbr.rel target = $region3
    $region8: #{tpu_custom_call.1} parent=1 // loop_exit
      _
    %1843 = vsyncpa [#allocation4], 1
    %s1844 = scalar_lea.sflag [#allocation4], 1
    %1845 = vsyncpa %s1844, 1
    %1846 = vsyncpa [#allocation7], 1
    %s1847 = scalar_lea.sflag [#allocation7], 1
    %1848 = vsyncpa %s1847, 1
    %1849 = vsyncpa [#allocation10], 1
    %1850 = vsyncpa [#allocation5], 1
    %s1851 = scalar_lea.sflag [#allocation5], 1
    %1852 = vsyncpa %s1851, 1
    %1853 = vsyncpa [#allocation13], 1
    %s1854 = scalar_lea.sflag [#allocation13], 1
    %1855 = vsyncpa %s1854, 1

</llo_original>
